<compile_context>
chip_gen: v7x
topology: tpu7x:2x2x1
jax: 0.10.0
libtpu: 0.0.40
codegen_flags: <defaults>
</compile_context>

<pallas_src>
import functools

import jax
import jax.numpy as jnp
from jax.experimental import pallas as pl
from jax.experimental.pallas import tpu as pltpu


def _encoder_layer_kernel(x_ref, wqkv_ref, bqkv_ref, wo_ref, bo_ref,
                          w1_ref, b1_ref, w2_ref, b2_ref,
                          ln1w_ref, ln1b_ref, ln2w_ref, ln2b_ref,
                          out_ref, attn_ref, *, L, N, H, dh, eps):
    # x_ref   : (T, E)  tokens, T = N*L, batch-major rows (rows of one batch contiguous)
    # wqkv_ref: (E, 3E) fused in_proj weight (pre-transposed);  bqkv_ref: (1, 3E)
    # wo_ref  : (E, E)  out_proj weight (pre-transposed);        bo_ref : (1, E)
    # w1_ref  : (E, F), w2_ref: (F, E) FFN weights (pre-transposed); b1/b2: (1, F)/(1, E)
    # ln*_ref : (1, E)  LayerNorm weight/bias rows
    # out_ref : (T, E)  encoded tokens;  attn_ref: (N, L, L) head-averaged attention weights
    E = H * dh
    scale = float(dh) ** -0.5
    x = x_ref[...]                                              # (T, E)
    wo = wo_ref[...]                                            # (E, E)

    # ---- fused QKV projection: one MXU matmul --------------------------------
    qkv = jnp.dot(x, wqkv_ref[...], preferred_element_type=jnp.float32) + bqkv_ref[...]
    q = qkv[:, 0:E] * scale          # scaling applied after bias, as in PyTorch MHA
    k = qkv[:, E:2 * E]
    v = qkv[:, 2 * E:3 * E]

    # ---- per-(batch, head) scaled-dot-product attention ----------------------
    # N and H are tiny and static: the loops fully unroll. Head outputs are fused
    # straight into the out-projection accumulator (concat(head_i) @ W_o ==
    # sum_i head_i @ W_o[i*dh:(i+1)*dh, :]), so no scratch slab / masked stores.
    src2_rows = []
    for n in range(N):
        qn = q[n * L:(n + 1) * L, :]
        kn = k[n * L:(n + 1) * L, :]
        vn = v[n * L:(n + 1) * L, :]
        acc = jnp.zeros((L, E), jnp.float32)                    # out-proj accumulator
        p_sum = jnp.zeros((L, L), jnp.float32)                  # for averaged attn weights
        for h in range(H):
            qh = qn[:, h * dh:(h + 1) * dh]                     # (L, dh)
            kh = kn[:, h * dh:(h + 1) * dh]
            vh = vn[:, h * dh:(h + 1) * dh]
            s = jax.lax.dot_general(qh, kh, (((1,), (1,)), ((), ())),
                                    preferred_element_type=jnp.float32)   # (L, S)
            m = jnp.max(s, axis=-1, keepdims=True)
            e = jnp.exp(s - m)
            p = e / jnp.sum(e, axis=-1, keepdims=True)
            # TODO(synk): attention-weight dropout is identity (dropout=0 / eval); not implemented.
            ao_h = jnp.dot(p, vh, preferred_element_type=jnp.float32)      # (L, dh)
            acc = acc + jnp.dot(ao_h, wo[h * dh:(h + 1) * dh, :],
                                preferred_element_type=jnp.float32)        # (L, E)
            p_sum = p_sum + p
        attn_ref[n] = p_sum * (1.0 / H)                         # head-averaged weights
        src2_rows.append(acc)

    # ---- out projection bias + residual + LayerNorm 1 --------------------------
    src2 = jnp.concatenate(src2_rows, axis=0) + bo_ref[...]     # (T, E)
    h1 = x + src2                                               # dropout1 is identity
    mu1 = jnp.mean(h1, axis=-1, keepdims=True)
    var1 = jnp.mean(jnp.square(h1 - mu1), axis=-1, keepdims=True)
    h1 = (h1 - mu1) * jax.lax.rsqrt(var1 + eps) * ln1w_ref[...] + ln1b_ref[...]

    # ---- feed-forward (relu) + residual + LayerNorm 2 --------------------------
    # TODO(synk): only activation='relu' (module default) is implemented; gelu not wired.
    f = jnp.maximum(jnp.dot(h1, w1_ref[...], preferred_element_type=jnp.float32)
                    + b1_ref[...], 0.0)
    src3 = jnp.dot(f, w2_ref[...], preferred_element_type=jnp.float32) + b2_ref[...]
    h2 = h1 + src3                                              # dropout2 is identity
    mu2 = jnp.mean(h2, axis=-1, keepdims=True)
    var2 = jnp.mean(jnp.square(h2 - mu2), axis=-1, keepdims=True)
    out_ref[...] = (h2 - mu2) * jax.lax.rsqrt(var2 + eps) * ln2w_ref[...] + ln2b_ref[...]


def transformer_encoder_layer_pallas(src, params, *, nhead, eps=1e-5):
    """src: (L, N, E) float32 (PyTorch seq-first layout).

    Returns (out (L, N, E), attn (N, L, L)) matching TransformerEncoderLayer.forward.
    """
    L, N, E = src.shape
    H = nhead
    assert E % H == 0, "embed_dim must be divisible by num_heads"
    dh = E // H
    Fdim = params["w1"].shape[0]
    T = N * L

    # Batch-major token slab (rows of one batch contiguous) -> lane-dense matmuls in-kernel.
    x2d = jnp.transpose(src, (1, 0, 2)).reshape(T, E)

    wqkv = params["in_proj_weight"].T              # (E, 3E)
    bqkv = params["in_proj_bias"][None, :]         # (1, 3E)
    wo = params["out_proj_weight"].T               # (E, E)
    bo = params["out_proj_bias"][None, :]
    w1 = params["w1"].T                            # (E, F)
    b1 = params["b1"][None, :]
    w2 = params["w2"].T                            # (F, E)
    b2 = params["b2"][None, :]
    ln1w = params["ln1_w"][None, :]
    ln1b = params["ln1_b"][None, :]
    ln2w = params["ln2_w"][None, :]
    ln2b = params["ln2_b"][None, :]

    kern = functools.partial(_encoder_layer_kernel, L=L, N=N, H=H, dh=dh, eps=eps)

    out2d, attn = pl.pallas_call(
        kern,
        out_shape=(jax.ShapeDtypeStruct((T, E), jnp.float32),
                   jax.ShapeDtypeStruct((N, L, L), jnp.float32)),
        grid=(1,),
        in_specs=[
            pl.BlockSpec((T, E), lambda i: (0, 0)),
            pl.BlockSpec((E, 3 * E), lambda i: (0, 0)),
            pl.BlockSpec((1, 3 * E), lambda i: (0, 0)),
            pl.BlockSpec((E, E), lambda i: (0, 0)),
            pl.BlockSpec((1, E), lambda i: (0, 0)),
            pl.BlockSpec((E, Fdim), lambda i: (0, 0)),
            pl.BlockSpec((1, Fdim), lambda i: (0, 0)),
            pl.BlockSpec((Fdim, E), lambda i: (0, 0)),
            pl.BlockSpec((1, E), lambda i: (0, 0)),
            pl.BlockSpec((1, E), lambda i: (0, 0)),
            pl.BlockSpec((1, E), lambda i: (0, 0)),
            pl.BlockSpec((1, E), lambda i: (0, 0)),
            pl.BlockSpec((1, E), lambda i: (0, 0)),
        ],
        out_specs=(pl.BlockSpec((T, E), lambda i: (0, 0)),
                   pl.BlockSpec((N, L, L), lambda i: (0, 0, 0))),
        compiler_params=pltpu.CompilerParams(dimension_semantics=("arbitrary",)),
    )(x2d, wqkv, bqkv, wo, bo, w1, b1, w2, b2, ln1w, ln1b, ln2w, ln2b)

    out = out2d.reshape(N, L, E).transpose(1, 0, 2)   # back to (L, N, E)
    return out, attn


def transformer_encoder_layer_ref(src, params, *, nhead, eps=1e-5):
    """Pure-JAX reference mirroring the PyTorch forward (eval mode, no masks)."""
    L, N, E = src.shape
    H = nhead
    dh = E // H
    w_in, b_in = params["in_proj_weight"], params["in_proj_bias"]
    hp = jax.lax.Precision.HIGHEST

    q = jnp.einsum('lne,fe->lnf', src, w_in[:E], precision=hp) + b_in[:E]
    k = jnp.einsum('lne,fe->lnf', src, w_in[E:2 * E], precision=hp) + b_in[E:2 * E]
    v = jnp.einsum('lne,fe->lnf', src, w_in[2 * E:], precision=hp) + b_in[2 * E:]
    q = q * (float(dh) ** -0.5)

    def heads(t):  # (L, N, E) -> (N*H, L, dh), matching torch's view/transpose
        return t.reshape(L, N * H, dh).transpose(1, 0, 2)

    qh, kh, vh = heads(q), heads(k), heads(v)
    s = jnp.einsum('bld,bsd->bls', qh, kh, precision=hp)
    p = jax.nn.softmax(s, axis=-1)
    ao = jnp.einsum('bls,bsd->bld', p, vh, precision=hp)
    ao = ao.transpose(1, 0, 2).reshape(L, N, E)
    src2 = jnp.einsum('lne,fe->lnf', ao, params["out_proj_weight"],
                      precision=hp) + params["out_proj_bias"]
    attn = p.reshape(N, H, L, L).sum(axis=1) / H

    def ln(x, w, b):
        mu = jnp.mean(x, axis=-1, keepdims=True)
        var = jnp.mean(jnp.square(x - mu), axis=-1, keepdims=True)
        return (x - mu) / jnp.sqrt(var + eps) * w + b

    x = ln(src + src2, params["ln1_w"], params["ln1_b"])
    f = jax.nn.relu(jnp.einsum('lne,fe->lnf', x, params["w1"], precision=hp) + params["b1"])
    x = ln(x + jnp.einsum('lnf,ef->lne', f, params["w2"], precision=hp) + params["b2"],
           params["ln2_w"], params["ln2_b"])
    return x, attn


if __name__ == "__main__":
    # TransformerEncoderLayer(d_model=32, nhead=4, dim_feedforward=64, dropout=0, 'relu')
    # on src of shape (seq L=8, batch N=2, embed E=32).
    L, N, E, H, Fdim = 8, 2, 32, 4, 64

    key = jax.random.PRNGKey(0)
    ks = jax.random.split(key, 13)
    params = {
        "in_proj_weight": 0.1 * jax.random.normal(ks[0], (3 * E, E), jnp.float32),
        "in_proj_bias": 0.01 * jax.random.normal(ks[1], (3 * E,), jnp.float32),
        "out_proj_weight": 0.1 * jax.random.normal(ks[2], (E, E), jnp.float32),
        "out_proj_bias": 0.01 * jax.random.normal(ks[3], (E,), jnp.float32),
        "w1": 0.1 * jax.random.normal(ks[4], (Fdim, E), jnp.float32),
        "b1": 0.01 * jax.random.normal(ks[5], (Fdim,), jnp.float32),
        "w2": 0.1 * jax.random.normal(ks[6], (E, Fdim), jnp.float32),
        "b2": 0.01 * jax.random.normal(ks[7], (E,), jnp.float32),
        "ln1_w": 1.0 + 0.05 * jax.random.normal(ks[8], (E,), jnp.float32),
        "ln1_b": 0.01 * jax.random.normal(ks[9], (E,), jnp.float32),
        "ln2_w": 1.0 + 0.05 * jax.random.normal(ks[10], (E,), jnp.float32),
        "ln2_b": 0.01 * jax.random.normal(ks[11], (E,), jnp.float32),
    }
    src = jax.random.normal(ks[12], (L, N, E), jnp.float32)

    y, attn = transformer_encoder_layer_pallas(src, params, nhead=H)
    y = jax.block_until_ready(y)
    attn = jax.block_until_ready(attn)

    y_ref, attn_ref = transformer_encoder_layer_ref(src, params, nhead=H)
    assert y.shape == (L, N, E) and attn.shape == (N, L, L)
    err_y = float(jnp.max(jnp.abs(y - y_ref)))
    err_a = float(jnp.max(jnp.abs(attn - attn_ref)))
    assert err_y < 1e-3 and err_a < 1e-4, f"mismatch: out {err_y}, attn {err_a}"
    print("KERNEL_OK")
</pallas_src>

<mosaic_0001>
module attributes {stable_mosaic.version = 11 : i64} {
  func.func @_encoder_layer_kernel(%arg0: i32, %arg1: memref<16x32xf32, #tpu.memory_space<vmem>>, %arg2: memref<32x96xf32, #tpu.memory_space<vmem>>, %arg3: memref<1x96xf32, #tpu.memory_space<vmem>>, %arg4: memref<32x32xf32, #tpu.memory_space<vmem>>, %arg5: memref<1x32xf32, #tpu.memory_space<vmem>>, %arg6: memref<32x64xf32, #tpu.memory_space<vmem>>, %arg7: memref<1x64xf32, #tpu.memory_space<vmem>>, %arg8: memref<64x32xf32, #tpu.memory_space<vmem>>, %arg9: memref<1x32xf32, #tpu.memory_space<vmem>>, %arg10: memref<1x32xf32, #tpu.memory_space<vmem>>, %arg11: memref<1x32xf32, #tpu.memory_space<vmem>>, %arg12: memref<1x32xf32, #tpu.memory_space<vmem>>, %arg13: memref<1x32xf32, #tpu.memory_space<vmem>>, %arg14: memref<16x32xf32, #tpu.memory_space<vmem>>, %arg15: memref<2x8x8xf32, #tpu.memory_space<vmem>>) attributes {dimension_semantics = [#tpu.dimension_semantics<arbitrary>], iteration_bounds = array<i64: 1>, scalar_prefetch = 0 : i64, scratch_operands = 0 : i64, tpu.core_type = #tpu.core_type<tc>, window_params = [{pipeline_mode = #tpu.pipeline_mode<synchronous>, transform_indices = @transform_0, window_bounds = array<i64: 16, 32>}, {pipeline_mode = #tpu.pipeline_mode<synchronous>, transform_indices = @transform_1, window_bounds = array<i64: 32, 96>}, {pipeline_mode = #tpu.pipeline_mode<synchronous>, transform_indices = @transform_2, window_bounds = array<i64: 1, 96>}, {pipeline_mode = #tpu.pipeline_mode<synchronous>, transform_indices = @transform_3, window_bounds = array<i64: 32, 32>}, {pipeline_mode = #tpu.pipeline_mode<synchronous>, transform_indices = @transform_4, window_bounds = array<i64: 1, 32>}, {pipeline_mode = #tpu.pipeline_mode<synchronous>, transform_indices = @transform_5, window_bounds = array<i64: 32, 64>}, {pipeline_mode = #tpu.pipeline_mode<synchronous>, transform_indices = @transform_6, window_bounds = array<i64: 1, 64>}, {pipeline_mode = #tpu.pipeline_mode<synchronous>, transform_indices = @transform_7, window_bounds = array<i64: 64, 32>}, {pipeline_mode = #tpu.pipeline_mode<synchronous>, transform_indices = @transform_8, window_bounds = array<i64: 1, 32>}, {pipeline_mode = #tpu.pipeline_mode<synchronous>, transform_indices = @transform_9, window_bounds = array<i64: 1, 32>}, {pipeline_mode = #tpu.pipeline_mode<synchronous>, transform_indices = @transform_10, window_bounds = array<i64: 1, 32>}, {pipeline_mode = #tpu.pipeline_mode<synchronous>, transform_indices = @transform_11, window_bounds = array<i64: 1, 32>}, {pipeline_mode = #tpu.pipeline_mode<synchronous>, transform_indices = @transform_12, window_bounds = array<i64: 1, 32>}, {pipeline_mode = #tpu.pipeline_mode<synchronous>, transform_indices = @transform_13, window_bounds = array<i64: 16, 32>}, {pipeline_mode = #tpu.pipeline_mode<synchronous>, transform_indices = @transform_14, window_bounds = array<i64: 2, 8, 8>}]} {
    %c0 = arith.constant 0 : index
    %c0_0 = arith.constant 0 : index
    %0 = vector.load %arg1[%c0, %c0_0] : memref<16x32xf32, #tpu.memory_space<vmem>>, vector<16x32xf32>
    %c0_1 = arith.constant 0 : index
    %c0_2 = arith.constant 0 : index
    %1 = vector.load %arg4[%c0_1, %c0_2] : memref<32x32xf32, #tpu.memory_space<vmem>>, vector<32x32xf32>
    %c0_3 = arith.constant 0 : index
    %c0_4 = arith.constant 0 : index
    %2 = vector.load %arg2[%c0_3, %c0_4] : memref<32x96xf32, #tpu.memory_space<vmem>>, vector<32x96xf32>
    %cst = arith.constant dense<0.000000e+00> : vector<16x96xf32>
    %3 = tpu.matmul %0, %2, %cst {dimension_numbers = #tpu.dot_dimension_numbers<[1], [0], [0], [1], [0, 0, 1, 1], [], []>} : vector<16x32xf32>, vector<32x96xf32>, vector<16x96xf32> -> vector<16x96xf32>
    %c0_5 = arith.constant 0 : index
    %c0_6 = arith.constant 0 : index
    %4 = vector.load %arg3[%c0_5, %c0_6] : memref<1x96xf32, #tpu.memory_space<vmem>>, vector<1x96xf32>
    %5 = vector.broadcast %4 : vector<1x96xf32> to vector<16x96xf32>
    %6 = arith.addf %3, %5 : vector<16x96xf32>
    %7 = vector.extract_strided_slice %6 {offsets = [0, 0], sizes = [16, 32], strides = [1, 1]} : vector<16x96xf32> to vector<16x32xf32>
    %cst_7 = arith.constant 0.353553385 : f32
    %8 = vector.broadcast %cst_7 : f32 to vector<16x32xf32>
    %9 = arith.mulf %7, %8 : vector<16x32xf32>
    %10 = vector.extract_strided_slice %6 {offsets = [0, 32], sizes = [16, 32], strides = [1, 1]} : vector<16x96xf32> to vector<16x32xf32>
    %11 = vector.extract_strided_slice %6 {offsets = [0, 64], sizes = [16, 32], strides = [1, 1]} : vector<16x96xf32> to vector<16x32xf32>
    %12 = vector.extract_strided_slice %9 {offsets = [0, 0], sizes = [8, 32], strides = [1, 1]} : vector<16x32xf32> to vector<8x32xf32>
    %13 = vector.extract_strided_slice %10 {offsets = [0, 0], sizes = [8, 32], strides = [1, 1]} : vector<16x32xf32> to vector<8x32xf32>
    %14 = vector.extract_strided_slice %11 {offsets = [0, 0], sizes = [8, 32], strides = [1, 1]} : vector<16x32xf32> to vector<8x32xf32>
    %cst_8 = arith.constant 0.000000e+00 : f32
    %15 = vector.broadcast %cst_8 : f32 to vector<8x32xf32>
    %cst_9 = arith.constant 0.000000e+00 : f32
    %16 = vector.broadcast %cst_9 : f32 to vector<8x8xf32>
    %17 = vector.extract_strided_slice %12 {offsets = [0, 0], sizes = [8, 8], strides = [1, 1]} : vector<8x32xf32> to vector<8x8xf32>
    %18 = vector.extract_strided_slice %13 {offsets = [0, 0], sizes = [8, 8], strides = [1, 1]} : vector<8x32xf32> to vector<8x8xf32>
    %19 = vector.extract_strided_slice %14 {offsets = [0, 0], sizes = [8, 8], strides = [1, 1]} : vector<8x32xf32> to vector<8x8xf32>
    %cst_10 = arith.constant dense<0.000000e+00> : vector<8x8xf32>
    %20 = tpu.matmul %17, %18, %cst_10 {dimension_numbers = #tpu.dot_dimension_numbers<[1], [1], [0], [0], [0, 0, 1, 0], [], []>} : vector<8x8xf32>, vector<8x8xf32>, vector<8x8xf32> -> vector<8x8xf32>
    %cst_11 = arith.constant dense<0xFF800000> : vector<8xf32>
    %21 = vector.multi_reduction <maximumf>, %20, %cst_11 [1] : vector<8x8xf32> to vector<8xf32>
    %22 = vector.shape_cast %21 : vector<8xf32> to vector<8x1xf32>
    %23 = vector.broadcast %22 : vector<8x1xf32> to vector<8x8xf32>
    %24 = arith.subf %20, %23 : vector<8x8xf32>
    %25 = math.exp %24 : vector<8x8xf32>
    %cst_12 = arith.constant dense<0.000000e+00> : vector<8xf32>
    %26 = vector.multi_reduction <add>, %25, %cst_12 [1] : vector<8x8xf32> to vector<8xf32>
    %27 = vector.shape_cast %26 : vector<8xf32> to vector<8x1xf32>
    %28 = vector.broadcast %27 : vector<8x1xf32> to vector<8x8xf32>
    %29 = arith.divf %25, %28 : vector<8x8xf32>
    %cst_13 = arith.constant dense<0.000000e+00> : vector<8x8xf32>
    %30 = tpu.matmul %29, %19, %cst_13 {dimension_numbers = #tpu.dot_dimension_numbers<[1], [0], [0], [1], [0, 0, 1, 1], [], []>} : vector<8x8xf32>, vector<8x8xf32>, vector<8x8xf32> -> vector<8x8xf32>
    %31 = vector.extract_strided_slice %1 {offsets = [0, 0], sizes = [8, 32], strides = [1, 1]} : vector<32x32xf32> to vector<8x32xf32>
    %cst_14 = arith.constant dense<0.000000e+00> : vector<8x32xf32>
    %32 = tpu.matmul %30, %31, %cst_14 {dimension_numbers = #tpu.dot_dimension_numbers<[1], [0], [0], [1], [0, 0, 1, 1], [], []>} : vector<8x8xf32>, vector<8x32xf32>, vector<8x32xf32> -> vector<8x32xf32>
    %33 = arith.addf %15, %32 : vector<8x32xf32>
    %34 = arith.addf %16, %29 : vector<8x8xf32>
    %35 = vector.extract_strided_slice %12 {offsets = [0, 8], sizes = [8, 8], strides = [1, 1]} : vector<8x32xf32> to vector<8x8xf32>
    %36 = vector.extract_strided_slice %13 {offsets = [0, 8], sizes = [8, 8], strides = [1, 1]} : vector<8x32xf32> to vector<8x8xf32>
    %37 = vector.extract_strided_slice %14 {offsets = [0, 8], sizes = [8, 8], strides = [1, 1]} : vector<8x32xf32> to vector<8x8xf32>
    %cst_15 = arith.constant dense<0.000000e+00> : vector<8x8xf32>
    %38 = tpu.matmul %35, %36, %cst_15 {dimension_numbers = #tpu.dot_dimension_numbers<[1], [1], [0], [0], [0, 0, 1, 0], [], []>} : vector<8x8xf32>, vector<8x8xf32>, vector<8x8xf32> -> vector<8x8xf32>
    %cst_16 = arith.constant dense<0xFF800000> : vector<8xf32>
    %39 = vector.multi_reduction <maximumf>, %38, %cst_16 [1] : vector<8x8xf32> to vector<8xf32>
    %40 = vector.shape_cast %39 : vector<8xf32> to vector<8x1xf32>
    %41 = vector.broadcast %40 : vector<8x1xf32> to vector<8x8xf32>
    %42 = arith.subf %38, %41 : vector<8x8xf32>
    %43 = math.exp %42 : vector<8x8xf32>
    %cst_17 = arith.constant dense<0.000000e+00> : vector<8xf32>
    %44 = vector.multi_reduction <add>, %43, %cst_17 [1] : vector<8x8xf32> to vector<8xf32>
    %45 = vector.shape_cast %44 : vector<8xf32> to vector<8x1xf32>
    %46 = vector.broadcast %45 : vector<8x1xf32> to vector<8x8xf32>
    %47 = arith.divf %43, %46 : vector<8x8xf32>
    %cst_18 = arith.constant dense<0.000000e+00> : vector<8x8xf32>
    %48 = tpu.matmul %47, %37, %cst_18 {dimension_numbers = #tpu.dot_dimension_numbers<[1], [0], [0], [1], [0, 0, 1, 1], [], []>} : vector<8x8xf32>, vector<8x8xf32>, vector<8x8xf32> -> vector<8x8xf32>
    %49 = vector.extract_strided_slice %1 {offsets = [8, 0], sizes = [8, 32], strides = [1, 1]} : vector<32x32xf32> to vector<8x32xf32>
    %cst_19 = arith.constant dense<0.000000e+00> : vector<8x32xf32>
    %50 = tpu.matmul %48, %49, %cst_19 {dimension_numbers = #tpu.dot_dimension_numbers<[1], [0], [0], [1], [0, 0, 1, 1], [], []>} : vector<8x8xf32>, vector<8x32xf32>, vector<8x32xf32> -> vector<8x32xf32>
    %51 = arith.addf %33, %50 : vector<8x32xf32>
    %52 = arith.addf %34, %47 : vector<8x8xf32>
    %53 = vector.extract_strided_slice %12 {offsets = [0, 16], sizes = [8, 8], strides = [1, 1]} : vector<8x32xf32> to vector<8x8xf32>
    %54 = vector.extract_strided_slice %13 {offsets = [0, 16], sizes = [8, 8], strides = [1, 1]} : vector<8x32xf32> to vector<8x8xf32>
    %55 = vector.extract_strided_slice %14 {offsets = [0, 16], sizes = [8, 8], strides = [1, 1]} : vector<8x32xf32> to vector<8x8xf32>
    %cst_20 = arith.constant dense<0.000000e+00> : vector<8x8xf32>
    %56 = tpu.matmul %53, %54, %cst_20 {dimension_numbers = #tpu.dot_dimension_numbers<[1], [1], [0], [0], [0, 0, 1, 0], [], []>} : vector<8x8xf32>, vector<8x8xf32>, vector<8x8xf32> -> vector<8x8xf32>
    %cst_21 = arith.constant dense<0xFF800000> : vector<8xf32>
    %57 = vector.multi_reduction <maximumf>, %56, %cst_21 [1] : vector<8x8xf32> to vector<8xf32>
    %58 = vector.shape_cast %57 : vector<8xf32> to vector<8x1xf32>
    %59 = vector.broadcast %58 : vector<8x1xf32> to vector<8x8xf32>
    %60 = arith.subf %56, %59 : vector<8x8xf32>
    %61 = math.exp %60 : vector<8x8xf32>
    %cst_22 = arith.constant dense<0.000000e+00> : vector<8xf32>
    %62 = vector.multi_reduction <add>, %61, %cst_22 [1] : vector<8x8xf32> to vector<8xf32>
    %63 = vector.shape_cast %62 : vector<8xf32> to vector<8x1xf32>
    %64 = vector.broadcast %63 : vector<8x1xf32> to vector<8x8xf32>
    %65 = arith.divf %61, %64 : vector<8x8xf32>
    %cst_23 = arith.constant dense<0.000000e+00> : vector<8x8xf32>
    %66 = tpu.matmul %65, %55, %cst_23 {dimension_numbers = #tpu.dot_dimension_numbers<[1], [0], [0], [1], [0, 0, 1, 1], [], []>} : vector<8x8xf32>, vector<8x8xf32>, vector<8x8xf32> -> vector<8x8xf32>
    %67 = vector.extract_strided_slice %1 {offsets = [16, 0], sizes = [8, 32], strides = [1, 1]} : vector<32x32xf32> to vector<8x32xf32>
    %cst_24 = arith.constant dense<0.000000e+00> : vector<8x32xf32>
    %68 = tpu.matmul %66, %67, %cst_24 {dimension_numbers = #tpu.dot_dimension_numbers<[1], [0], [0], [1], [0, 0, 1, 1], [], []>} : vector<8x8xf32>, vector<8x32xf32>, vector<8x32xf32> -> vector<8x32xf32>
    %69 = arith.addf %51, %68 : vector<8x32xf32>
    %70 = arith.addf %52, %65 : vector<8x8xf32>
    %71 = vector.extract_strided_slice %12 {offsets = [0, 24], sizes = [8, 8], strides = [1, 1]} : vector<8x32xf32> to vector<8x8xf32>
    %72 = vector.extract_strided_slice %13 {offsets = [0, 24], sizes = [8, 8], strides = [1, 1]} : vector<8x32xf32> to vector<8x8xf32>
    %73 = vector.extract_strided_slice %14 {offsets = [0, 24], sizes = [8, 8], strides = [1, 1]} : vector<8x32xf32> to vector<8x8xf32>
    %cst_25 = arith.constant dense<0.000000e+00> : vector<8x8xf32>
    %74 = tpu.matmul %71, %72, %cst_25 {dimension_numbers = #tpu.dot_dimension_numbers<[1], [1], [0], [0], [0, 0, 1, 0], [], []>} : vector<8x8xf32>, vector<8x8xf32>, vector<8x8xf32> -> vector<8x8xf32>
    %cst_26 = arith.constant dense<0xFF800000> : vector<8xf32>
    %75 = vector.multi_reduction <maximumf>, %74, %cst_26 [1] : vector<8x8xf32> to vector<8xf32>
    %76 = vector.shape_cast %75 : vector<8xf32> to vector<8x1xf32>
    %77 = vector.broadcast %76 : vector<8x1xf32> to vector<8x8xf32>
    %78 = arith.subf %74, %77 : vector<8x8xf32>
    %79 = math.exp %78 : vector<8x8xf32>
    %cst_27 = arith.constant dense<0.000000e+00> : vector<8xf32>
    %80 = vector.multi_reduction <add>, %79, %cst_27 [1] : vector<8x8xf32> to vector<8xf32>
    %81 = vector.shape_cast %80 : vector<8xf32> to vector<8x1xf32>
    %82 = vector.broadcast %81 : vector<8x1xf32> to vector<8x8xf32>
    %83 = arith.divf %79, %82 : vector<8x8xf32>
    %cst_28 = arith.constant dense<0.000000e+00> : vector<8x8xf32>
    %84 = tpu.matmul %83, %73, %cst_28 {dimension_numbers = #tpu.dot_dimension_numbers<[1], [0], [0], [1], [0, 0, 1, 1], [], []>} : vector<8x8xf32>, vector<8x8xf32>, vector<8x8xf32> -> vector<8x8xf32>
    %85 = vector.extract_strided_slice %1 {offsets = [24, 0], sizes = [8, 32], strides = [1, 1]} : vector<32x32xf32> to vector<8x32xf32>
    %cst_29 = arith.constant dense<0.000000e+00> : vector<8x32xf32>
    %86 = tpu.matmul %84, %85, %cst_29 {dimension_numbers = #tpu.dot_dimension_numbers<[1], [0], [0], [1], [0, 0, 1, 1], [], []>} : vector<8x8xf32>, vector<8x32xf32>, vector<8x32xf32> -> vector<8x32xf32>
    %87 = arith.addf %69, %86 : vector<8x32xf32>
    %88 = arith.addf %70, %83 : vector<8x8xf32>
    %cst_30 = arith.constant 2.500000e-01 : f32
    %89 = vector.broadcast %cst_30 : f32 to vector<8x8xf32>
    %90 = arith.mulf %88, %89 : vector<8x8xf32>
    %c0_31 = arith.constant 0 : index
    %c0_32 = arith.constant 0 : index
    %c0_33 = arith.constant 0 : index
    %91 = vector.load %arg15[%c0_31, %c0_32, %c0_33] : memref<2x8x8xf32, #tpu.memory_space<vmem>>, vector<1x8x8xf32>
    %92 = vector.shape_cast %91 : vector<1x8x8xf32> to vector<8x8xf32>
    %93 = vector.shape_cast %90 : vector<8x8xf32> to vector<1x8x8xf32>
    tpu.vector_store %arg15[%c0_31, %c0_32, %c0_33], %93 {strides = array<i32>} : memref<2x8x8xf32, #tpu.memory_space<vmem>>, vector<1x8x8xf32>,
    %94 = vector.extract_strided_slice %9 {offsets = [8, 0], sizes = [8, 32], strides = [1, 1]} : vector<16x32xf32> to vector<8x32xf32>
    %95 = vector.extract_strided_slice %10 {offsets = [8, 0], sizes = [8, 32], strides = [1, 1]} : vector<16x32xf32> to vector<8x32xf32>
    %96 = vector.extract_strided_slice %11 {offsets = [8, 0], sizes = [8, 32], strides = [1, 1]} : vector<16x32xf32> to vector<8x32xf32>
    %cst_34 = arith.constant 0.000000e+00 : f32
    %97 = vector.broadcast %cst_34 : f32 to vector<8x32xf32>
    %cst_35 = arith.constant 0.000000e+00 : f32
    %98 = vector.broadcast %cst_35 : f32 to vector<8x8xf32>
    %99 = vector.extract_strided_slice %94 {offsets = [0, 0], sizes = [8, 8], strides = [1, 1]} : vector<8x32xf32> to vector<8x8xf32>
    %100 = vector.extract_strided_slice %95 {offsets = [0, 0], sizes = [8, 8], strides = [1, 1]} : vector<8x32xf32> to vector<8x8xf32>
    %101 = vector.extract_strided_slice %96 {offsets = [0, 0], sizes = [8, 8], strides = [1, 1]} : vector<8x32xf32> to vector<8x8xf32>
    %cst_36 = arith.constant dense<0.000000e+00> : vector<8x8xf32>
    %102 = tpu.matmul %99, %100, %cst_36 {dimension_numbers = #tpu.dot_dimension_numbers<[1], [1], [0], [0], [0, 0, 1, 0], [], []>} : vector<8x8xf32>, vector<8x8xf32>, vector<8x8xf32> -> vector<8x8xf32>
    %cst_37 = arith.constant dense<0xFF800000> : vector<8xf32>
    %103 = vector.multi_reduction <maximumf>, %102, %cst_37 [1] : vector<8x8xf32> to vector<8xf32>
    %104 = vector.shape_cast %103 : vector<8xf32> to vector<8x1xf32>
    %105 = vector.broadcast %104 : vector<8x1xf32> to vector<8x8xf32>
    %106 = arith.subf %102, %105 : vector<8x8xf32>
    %107 = math.exp %106 : vector<8x8xf32>
    %cst_38 = arith.constant dense<0.000000e+00> : vector<8xf32>
    %108 = vector.multi_reduction <add>, %107, %cst_38 [1] : vector<8x8xf32> to vector<8xf32>
    %109 = vector.shape_cast %108 : vector<8xf32> to vector<8x1xf32>
    %110 = vector.broadcast %109 : vector<8x1xf32> to vector<8x8xf32>
    %111 = arith.divf %107, %110 : vector<8x8xf32>
    %cst_39 = arith.constant dense<0.000000e+00> : vector<8x8xf32>
    %112 = tpu.matmul %111, %101, %cst_39 {dimension_numbers = #tpu.dot_dimension_numbers<[1], [0], [0], [1], [0, 0, 1, 1], [], []>} : vector<8x8xf32>, vector<8x8xf32>, vector<8x8xf32> -> vector<8x8xf32>
    %113 = vector.extract_strided_slice %1 {offsets = [0, 0], sizes = [8, 32], strides = [1, 1]} : vector<32x32xf32> to vector<8x32xf32>
    %cst_40 = arith.constant dense<0.000000e+00> : vector<8x32xf32>
    %114 = tpu.matmul %112, %113, %cst_40 {dimension_numbers = #tpu.dot_dimension_numbers<[1], [0], [0], [1], [0, 0, 1, 1], [], []>} : vector<8x8xf32>, vector<8x32xf32>, vector<8x32xf32> -> vector<8x32xf32>
    %115 = arith.addf %97, %114 : vector<8x32xf32>
    %116 = arith.addf %98, %111 : vector<8x8xf32>
    %117 = vector.extract_strided_slice %94 {offsets = [0, 8], sizes = [8, 8], strides = [1, 1]} : vector<8x32xf32> to vector<8x8xf32>
    %118 = vector.extract_strided_slice %95 {offsets = [0, 8], sizes = [8, 8], strides = [1, 1]} : vector<8x32xf32> to vector<8x8xf32>
    %119 = vector.extract_strided_slice %96 {offsets = [0, 8], sizes = [8, 8], strides = [1, 1]} : vector<8x32xf32> to vector<8x8xf32>
    %cst_41 = arith.constant dense<0.000000e+00> : vector<8x8xf32>
    %120 = tpu.matmul %117, %118, %cst_41 {dimension_numbers = #tpu.dot_dimension_numbers<[1], [1], [0], [0], [0, 0, 1, 0], [], []>} : vector<8x8xf32>, vector<8x8xf32>, vector<8x8xf32> -> vector<8x8xf32>
    %cst_42 = arith.constant dense<0xFF800000> : vector<8xf32>
    %121 = vector.multi_reduction <maximumf>, %120, %cst_42 [1] : vector<8x8xf32> to vector<8xf32>
    %122 = vector.shape_cast %121 : vector<8xf32> to vector<8x1xf32>
    %123 = vector.broadcast %122 : vector<8x1xf32> to vector<8x8xf32>
    %124 = arith.subf %120, %123 : vector<8x8xf32>
    %125 = math.exp %124 : vector<8x8xf32>
    %cst_43 = arith.constant dense<0.000000e+00> : vector<8xf32>
    %126 = vector.multi_reduction <add>, %125, %cst_43 [1] : vector<8x8xf32> to vector<8xf32>
    %127 = vector.shape_cast %126 : vector<8xf32> to vector<8x1xf32>
    %128 = vector.broadcast %127 : vector<8x1xf32> to vector<8x8xf32>
    %129 = arith.divf %125, %128 : vector<8x8xf32>
    %cst_44 = arith.constant dense<0.000000e+00> : vector<8x8xf32>
    %130 = tpu.matmul %129, %119, %cst_44 {dimension_numbers = #tpu.dot_dimension_numbers<[1], [0], [0], [1], [0, 0, 1, 1], [], []>} : vector<8x8xf32>, vector<8x8xf32>, vector<8x8xf32> -> vector<8x8xf32>
    %131 = vector.extract_strided_slice %1 {offsets = [8, 0], sizes = [8, 32], strides = [1, 1]} : vector<32x32xf32> to vector<8x32xf32>
    %cst_45 = arith.constant dense<0.000000e+00> : vector<8x32xf32>
    %132 = tpu.matmul %130, %131, %cst_45 {dimension_numbers = #tpu.dot_dimension_numbers<[1], [0], [0], [1], [0, 0, 1, 1], [], []>} : vector<8x8xf32>, vector<8x32xf32>, vector<8x32xf32> -> vector<8x32xf32>
    %133 = arith.addf %115, %132 : vector<8x32xf32>
    %134 = arith.addf %116, %129 : vector<8x8xf32>
    %135 = vector.extract_strided_slice %94 {offsets = [0, 16], sizes = [8, 8], strides = [1, 1]} : vector<8x32xf32> to vector<8x8xf32>
    %136 = vector.extract_strided_slice %95 {offsets = [0, 16], sizes = [8, 8], strides = [1, 1]} : vector<8x32xf32> to vector<8x8xf32>
    %137 = vector.extract_strided_slice %96 {offsets = [0, 16], sizes = [8, 8], strides = [1, 1]} : vector<8x32xf32> to vector<8x8xf32>
    %cst_46 = arith.constant dense<0.000000e+00> : vector<8x8xf32>
    %138 = tpu.matmul %135, %136, %cst_46 {dimension_numbers = #tpu.dot_dimension_numbers<[1], [1], [0], [0], [0, 0, 1, 0], [], []>} : vector<8x8xf32>, vector<8x8xf32>, vector<8x8xf32> -> vector<8x8xf32>
    %cst_47 = arith.constant dense<0xFF800000> : vector<8xf32>
    %139 = vector.multi_reduction <maximumf>, %138, %cst_47 [1] : vector<8x8xf32> to vector<8xf32>
    %140 = vector.shape_cast %139 : vector<8xf32> to vector<8x1xf32>
    %141 = vector.broadcast %140 : vector<8x1xf32> to vector<8x8xf32>
    %142 = arith.subf %138, %141 : vector<8x8xf32>
    %143 = math.exp %142 : vector<8x8xf32>
    %cst_48 = arith.constant dense<0.000000e+00> : vector<8xf32>
    %144 = vector.multi_reduction <add>, %143, %cst_48 [1] : vector<8x8xf32> to vector<8xf32>
    %145 = vector.shape_cast %144 : vector<8xf32> to vector<8x1xf32>
    %146 = vector.broadcast %145 : vector<8x1xf32> to vector<8x8xf32>
    %147 = arith.divf %143, %146 : vector<8x8xf32>
    %cst_49 = arith.constant dense<0.000000e+00> : vector<8x8xf32>
    %148 = tpu.matmul %147, %137, %cst_49 {dimension_numbers = #tpu.dot_dimension_numbers<[1], [0], [0], [1], [0, 0, 1, 1], [], []>} : vector<8x8xf32>, vector<8x8xf32>, vector<8x8xf32> -> vector<8x8xf32>
    %149 = vector.extract_strided_slice %1 {offsets = [16, 0], sizes = [8, 32], strides = [1, 1]} : vector<32x32xf32> to vector<8x32xf32>
    %cst_50 = arith.constant dense<0.000000e+00> : vector<8x32xf32>
    %150 = tpu.matmul %148, %149, %cst_50 {dimension_numbers = #tpu.dot_dimension_numbers<[1], [0], [0], [1], [0, 0, 1, 1], [], []>} : vector<8x8xf32>, vector<8x32xf32>, vector<8x32xf32> -> vector<8x32xf32>
    %151 = arith.addf %133, %150 : vector<8x32xf32>
    %152 = arith.addf %134, %147 : vector<8x8xf32>
    %153 = vector.extract_strided_slice %94 {offsets = [0, 24], sizes = [8, 8], strides = [1, 1]} : vector<8x32xf32> to vector<8x8xf32>
    %154 = vector.extract_strided_slice %95 {offsets = [0, 24], sizes = [8, 8], strides = [1, 1]} : vector<8x32xf32> to vector<8x8xf32>
    %155 = vector.extract_strided_slice %96 {offsets = [0, 24], sizes = [8, 8], strides = [1, 1]} : vector<8x32xf32> to vector<8x8xf32>
    %cst_51 = arith.constant dense<0.000000e+00> : vector<8x8xf32>
    %156 = tpu.matmul %153, %154, %cst_51 {dimension_numbers = #tpu.dot_dimension_numbers<[1], [1], [0], [0], [0, 0, 1, 0], [], []>} : vector<8x8xf32>, vector<8x8xf32>, vector<8x8xf32> -> vector<8x8xf32>
    %cst_52 = arith.constant dense<0xFF800000> : vector<8xf32>
    %157 = vector.multi_reduction <maximumf>, %156, %cst_52 [1] : vector<8x8xf32> to vector<8xf32>
    %158 = vector.shape_cast %157 : vector<8xf32> to vector<8x1xf32>
    %159 = vector.broadcast %158 : vector<8x1xf32> to vector<8x8xf32>
    %160 = arith.subf %156, %159 : vector<8x8xf32>
    %161 = math.exp %160 : vector<8x8xf32>
    %cst_53 = arith.constant dense<0.000000e+00> : vector<8xf32>
    %162 = vector.multi_reduction <add>, %161, %cst_53 [1] : vector<8x8xf32> to vector<8xf32>
    %163 = vector.shape_cast %162 : vector<8xf32> to vector<8x1xf32>
    %164 = vector.broadcast %163 : vector<8x1xf32> to vector<8x8xf32>
    %165 = arith.divf %161, %164 : vector<8x8xf32>
    %cst_54 = arith.constant dense<0.000000e+00> : vector<8x8xf32>
    %166 = tpu.matmul %165, %155, %cst_54 {dimension_numbers = #tpu.dot_dimension_numbers<[1], [0], [0], [1], [0, 0, 1, 1], [], []>} : vector<8x8xf32>, vector<8x8xf32>, vector<8x8xf32> -> vector<8x8xf32>
    %167 = vector.extract_strided_slice %1 {offsets = [24, 0], sizes = [8, 32], strides = [1, 1]} : vector<32x32xf32> to vector<8x32xf32>
    %cst_55 = arith.constant dense<0.000000e+00> : vector<8x32xf32>
    %168 = tpu.matmul %166, %167, %cst_55 {dimension_numbers = #tpu.dot_dimension_numbers<[1], [0], [0], [1], [0, 0, 1, 1], [], []>} : vector<8x8xf32>, vector<8x32xf32>, vector<8x32xf32> -> vector<8x32xf32>
    %169 = arith.addf %151, %168 : vector<8x32xf32>
    %170 = arith.addf %152, %165 : vector<8x8xf32>
    %cst_56 = arith.constant 2.500000e-01 : f32
    %171 = vector.broadcast %cst_56 : f32 to vector<8x8xf32>
    %172 = arith.mulf %170, %171 : vector<8x8xf32>
    %c1 = arith.constant 1 : index
    %c0_57 = arith.constant 0 : index
    %c0_58 = arith.constant 0 : index
    %173 = vector.load %arg15[%c1, %c0_57, %c0_58] : memref<2x8x8xf32, #tpu.memory_space<vmem>>, vector<1x8x8xf32>
    %174 = vector.shape_cast %173 : vector<1x8x8xf32> to vector<8x8xf32>
    %175 = vector.shape_cast %172 : vector<8x8xf32> to vector<1x8x8xf32>
    tpu.vector_store %arg15[%c1, %c0_57, %c0_58], %175 {strides = array<i32>} : memref<2x8x8xf32, #tpu.memory_space<vmem>>, vector<1x8x8xf32>,
    %176 = tpu.concatenate %87, %169 in 0 : vector<8x32xf32>, vector<8x32xf32> -> vector<16x32xf32>
    %c0_59 = arith.constant 0 : index
    %c0_60 = arith.constant 0 : index
    %177 = vector.load %arg5[%c0_59, %c0_60] : memref<1x32xf32, #tpu.memory_space<vmem>>, vector<1x32xf32>
    %178 = vector.broadcast %177 : vector<1x32xf32> to vector<16x32xf32>
    %179 = arith.addf %176, %178 : vector<16x32xf32>
    %180 = arith.addf %0, %179 : vector<16x32xf32>
    %cst_61 = arith.constant dense<0.000000e+00> : vector<16xf32>
    %181 = vector.multi_reduction <add>, %180, %cst_61 [1] : vector<16x32xf32> to vector<16xf32>
    %182 = vector.shape_cast %181 : vector<16xf32> to vector<16x1xf32>
    %cst_62 = arith.constant 3.200000e+01 : f32
    %183 = vector.broadcast %cst_62 : f32 to vector<16x1xf32>
    %184 = arith.divf %182, %183 : vector<16x1xf32>
    %185 = vector.broadcast %184 : vector<16x1xf32> to vector<16x32xf32>
    %186 = arith.subf %180, %185 : vector<16x32xf32>
    %187 = arith.mulf %186, %186 : vector<16x32xf32>
    %cst_63 = arith.constant dense<0.000000e+00> : vector<16xf32>
    %188 = vector.multi_reduction <add>, %187, %cst_63 [1] : vector<16x32xf32> to vector<16xf32>
    %189 = vector.shape_cast %188 : vector<16xf32> to vector<16x1xf32>
    %cst_64 = arith.constant 3.200000e+01 : f32
    %190 = vector.broadcast %cst_64 : f32 to vector<16x1xf32>
    %191 = arith.divf %189, %190 : vector<16x1xf32>
    %192 = vector.broadcast %184 : vector<16x1xf32> to vector<16x32xf32>
    %193 = arith.subf %180, %192 : vector<16x32xf32>
    %cst_65 = arith.constant 9.99999974E-6 : f32
    %194 = vector.broadcast %cst_65 : f32 to vector<16x1xf32>
    %195 = arith.addf %191, %194 : vector<16x1xf32>
    %196 = math.rsqrt %195 : vector<16x1xf32>
    %197 = vector.broadcast %196 : vector<16x1xf32> to vector<16x32xf32>
    %198 = arith.mulf %193, %197 : vector<16x32xf32>
    %c0_66 = arith.constant 0 : index
    %c0_67 = arith.constant 0 : index
    %199 = vector.load %arg10[%c0_66, %c0_67] : memref<1x32xf32, #tpu.memory_space<vmem>>, vector<1x32xf32>
    %200 = vector.broadcast %199 : vector<1x32xf32> to vector<16x32xf32>
    %201 = arith.mulf %198, %200 : vector<16x32xf32>
    %c0_68 = arith.constant 0 : index
    %c0_69 = arith.constant 0 : index
    %202 = vector.load %arg11[%c0_68, %c0_69] : memref<1x32xf32, #tpu.memory_space<vmem>>, vector<1x32xf32>
    %203 = vector.broadcast %202 : vector<1x32xf32> to vector<16x32xf32>
    %204 = arith.addf %201, %203 : vector<16x32xf32>
    %c0_70 = arith.constant 0 : index
    %c0_71 = arith.constant 0 : index
    %205 = vector.load %arg6[%c0_70, %c0_71] : memref<32x64xf32, #tpu.memory_space<vmem>>, vector<32x64xf32>
    %cst_72 = arith.constant dense<0.000000e+00> : vector<16x64xf32>
    %206 = tpu.matmul %204, %205, %cst_72 {dimension_numbers = #tpu.dot_dimension_numbers<[1], [0], [0], [1], [0, 0, 1, 1], [], []>} : vector<16x32xf32>, vector<32x64xf32>, vector<16x64xf32> -> vector<16x64xf32>
    %c0_73 = arith.constant 0 : index
    %c0_74 = arith.constant 0 : index
    %207 = vector.load %arg7[%c0_73, %c0_74] : memref<1x64xf32, #tpu.memory_space<vmem>>, vector<1x64xf32>
    %208 = vector.broadcast %207 : vector<1x64xf32> to vector<16x64xf32>
    %209 = arith.addf %206, %208 : vector<16x64xf32>
    %cst_75 = arith.constant 0.000000e+00 : f32
    %210 = vector.broadcast %cst_75 : f32 to vector<16x64xf32>
    %211 = arith.maximumf %209, %210 : vector<16x64xf32>
    %c0_76 = arith.constant 0 : index
    %c0_77 = arith.constant 0 : index
    %212 = vector.load %arg8[%c0_76, %c0_77] : memref<64x32xf32, #tpu.memory_space<vmem>>, vector<64x32xf32>
    %cst_78 = arith.constant dense<0.000000e+00> : vector<16x32xf32>
    %213 = tpu.matmul %211, %212, %cst_78 {dimension_numbers = #tpu.dot_dimension_numbers<[1], [0], [0], [1], [0, 0, 1, 1], [], []>} : vector<16x64xf32>, vector<64x32xf32>, vector<16x32xf32> -> vector<16x32xf32>
    %c0_79 = arith.constant 0 : index
    %c0_80 = arith.constant 0 : index
    %214 = vector.load %arg9[%c0_79, %c0_80] : memref<1x32xf32, #tpu.memory_space<vmem>>, vector<1x32xf32>
    %215 = vector.broadcast %214 : vector<1x32xf32> to vector<16x32xf32>
    %216 = arith.addf %213, %215 : vector<16x32xf32>
    %217 = arith.addf %204, %216 : vector<16x32xf32>
    %cst_81 = arith.constant dense<0.000000e+00> : vector<16xf32>
    %218 = vector.multi_reduction <add>, %217, %cst_81 [1] : vector<16x32xf32> to vector<16xf32>
    %219 = vector.shape_cast %218 : vector<16xf32> to vector<16x1xf32>
    %cst_82 = arith.constant 3.200000e+01 : f32
    %220 = vector.broadcast %cst_82 : f32 to vector<16x1xf32>
    %221 = arith.divf %219, %220 : vector<16x1xf32>
    %222 = vector.broadcast %221 : vector<16x1xf32> to vector<16x32xf32>
    %223 = arith.subf %217, %222 : vector<16x32xf32>
    %224 = arith.mulf %223, %223 : vector<16x32xf32>
    %cst_83 = arith.constant dense<0.000000e+00> : vector<16xf32>
    %225 = vector.multi_reduction <add>, %224, %cst_83 [1] : vector<16x32xf32> to vector<16xf32>
    %226 = vector.shape_cast %225 : vector<16xf32> to vector<16x1xf32>
    %cst_84 = arith.constant 3.200000e+01 : f32
    %227 = vector.broadcast %cst_84 : f32 to vector<16x1xf32>
    %228 = arith.divf %226, %227 : vector<16x1xf32>
    %229 = vector.broadcast %221 : vector<16x1xf32> to vector<16x32xf32>
    %230 = arith.subf %217, %229 : vector<16x32xf32>
    %cst_85 = arith.constant 9.99999974E-6 : f32
    %231 = vector.broadcast %cst_85 : f32 to vector<16x1xf32>
    %232 = arith.addf %228, %231 : vector<16x1xf32>
    %233 = math.rsqrt %232 : vector<16x1xf32>
    %234 = vector.broadcast %233 : vector<16x1xf32> to vector<16x32xf32>
    %235 = arith.mulf %230, %234 : vector<16x32xf32>
    %c0_86 = arith.constant 0 : index
    %c0_87 = arith.constant 0 : index
    %236 = vector.load %arg12[%c0_86, %c0_87] : memref<1x32xf32, #tpu.memory_space<vmem>>, vector<1x32xf32>
    %237 = vector.broadcast %236 : vector<1x32xf32> to vector<16x32xf32>
    %238 = arith.mulf %235, %237 : vector<16x32xf32>
    %c0_88 = arith.constant 0 : index
    %c0_89 = arith.constant 0 : index
    %239 = vector.load %arg13[%c0_88, %c0_89] : memref<1x32xf32, #tpu.memory_space<vmem>>, vector<1x32xf32>
    %240 = vector.broadcast %239 : vector<1x32xf32> to vector<16x32xf32>
    %241 = arith.addf %238, %240 : vector<16x32xf32>
    %c0_90 = arith.constant 0 : index
    %c0_91 = arith.constant 0 : index
    %242 = vector.load %arg14[%c0_90, %c0_91] : memref<16x32xf32, #tpu.memory_space<vmem>>, vector<16x32xf32>
    tpu.vector_store %arg14[%c0_90, %c0_91], %241 {strides = array<i32>} : memref<16x32xf32, #tpu.memory_space<vmem>>, vector<16x32xf32>,
    return
  }
  func.func @transform_0(%arg0: i32) -> (i32, i32) {
    %c0_i32 = arith.constant 0 : i32
    %c0_i32_0 = arith.constant 0 : i32
    %c0_i32_1 = arith.constant 0 : i32
    return %c0_i32, %c0_i32_0 : i32, i32
  }
  func.func @transform_1(%arg0: i32) -> (i32, i32) {
    %c0_i32 = arith.constant 0 : i32
    %c0_i32_0 = arith.constant 0 : i32
    %c0_i32_1 = arith.constant 0 : i32
    return %c0_i32, %c0_i32_0 : i32, i32
  }
  func.func @transform_2(%arg0: i32) -> (i32, i32) {
    %c0_i32 = arith.constant 0 : i32
    %c0_i32_0 = arith.constant 0 : i32
    %c0_i32_1 = arith.constant 0 : i32
    return %c0_i32, %c0_i32_0 : i32, i32
  }
  func.func @transform_3(%arg0: i32) -> (i32, i32) {
    %c0_i32 = arith.constant 0 : i32
    %c0_i32_0 = arith.constant 0 : i32
    %c0_i32_1 = arith.constant 0 : i32
    return %c0_i32, %c0_i32_0 : i32, i32
  }
  func.func @transform_4(%arg0: i32) -> (i32, i32) {
    %c0_i32 = arith.constant 0 : i32
    %c0_i32_0 = arith.constant 0 : i32
    %c0_i32_1 = arith.constant 0 : i32
    return %c0_i32, %c0_i32_0 : i32, i32
  }
  func.func @transform_5(%arg0: i32) -> (i32, i32) {
    %c0_i32 = arith.constant 0 : i32
    %c0_i32_0 = arith.constant 0 : i32
    %c0_i32_1 = arith.constant 0 : i32
    return %c0_i32, %c0_i32_0 : i32, i32
  }
  func.func @transform_6(%arg0: i32) -> (i32, i32) {
    %c0_i32 = arith.constant 0 : i32
    %c0_i32_0 = arith.constant 0 : i32
    %c0_i32_1 = arith.constant 0 : i32
    return %c0_i32, %c0_i32_0 : i32, i32
  }
  func.func @transform_7(%arg0: i32) -> (i32, i32) {
    %c0_i32 = arith.constant 0 : i32
    %c0_i32_0 = arith.constant 0 : i32
    %c0_i32_1 = arith.constant 0 : i32
    return %c0_i32, %c0_i32_0 : i32, i32
  }
  func.func @transform_8(%arg0: i32) -> (i32, i32) {
    %c0_i32 = arith.constant 0 : i32
    %c0_i32_0 = arith.constant 0 : i32
    %c0_i32_1 = arith.constant 0 : i32
    return %c0_i32, %c0_i32_0 : i32, i32
  }
  func.func @transform_9(%arg0: i32) -> (i32, i32) {
    %c0_i32 = arith.constant 0 : i32
    %c0_i32_0 = arith.constant 0 : i32
    %c0_i32_1 = arith.constant 0 : i32
    return %c0_i32, %c0_i32_0 : i32, i32
  }
  func.func @transform_10(%arg0: i32) -> (i32, i32) {
    %c0_i32 = arith.constant 0 : i32
    %c0_i32_0 = arith.constant 0 : i32
    %c0_i32_1 = arith.constant 0 : i32
    return %c0_i32, %c0_i32_0 : i32, i32
  }
  func.func @transform_11(%arg0: i32) -> (i32, i32) {
    %c0_i32 = arith.constant 0 : i32
    %c0_i32_0 = arith.constant 0 : i32
    %c0_i32_1 = arith.constant 0 : i32
    return %c0_i32, %c0_i32_0 : i32, i32
  }
  func.func @transform_12(%arg0: i32) -> (i32, i32) {
    %c0_i32 = arith.constant 0 : i32
    %c0_i32_0 = arith.constant 0 : i32
    %c0_i32_1 = arith.constant 0 : i32
    return %c0_i32, %c0_i32_0 : i32, i32
  }
  func.func @transform_13(%arg0: i32) -> (i32, i32) {
    %c0_i32 = arith.constant 0 : i32
    %c0_i32_0 = arith.constant 0 : i32
    %c0_i32_1 = arith.constant 0 : i32
    return %c0_i32, %c0_i32_0 : i32, i32
  }
  func.func @transform_14(%arg0: i32) -> (i32, i32, i32) {
    %c0_i32 = arith.constant 0 : i32
    %c0_i32_0 = arith.constant 0 : i32
    %c0_i32_1 = arith.constant 0 : i32
    %c0_i32_2 = arith.constant 0 : i32
    return %c0_i32, %c0_i32_0, %c0_i32_1 : i32, i32, i32
  }
}

</mosaic_0001>

<llo_original>
// kernel: tpu_custom_call.1
$region0: #{tpu_custom_call.1}
  #allocation0 [shape = 'u32[]', space=smem, size = 0x4, offset = 0x4, fixed_abs, tag = 'smem constant byte address 0x4 - core index']
  #allocation1 [shape = 'u32[144,128]{1,0:T(1,128)}', space=vmem, size = 0x12000, scoped, tag = 'internal scratch']
  %s0 = inlined_call_operand.hbm [shape: f32[16,32], index: 0, kind: input, shape index: {}]
  %s1 = inlined_call_operand.vmem [shape: f32[32,96], index: 1, kind: input, shape index: {}]
  %s2 = inlined_call_operand.vmem [shape: f32[1,96], index: 2, kind: input, shape index: {}]
  %s3 = inlined_call_operand.vmem [shape: f32[32,32], index: 3, kind: input, shape index: {}]
  %s4 = inlined_call_operand.vmem [shape: f32[1,32], index: 4, kind: input, shape index: {}]
  %s5 = inlined_call_operand.vmem [shape: f32[32,64], index: 5, kind: input, shape index: {}]
  %s6 = inlined_call_operand.vmem [shape: f32[1,64], index: 6, kind: input, shape index: {}]
  %s7 = inlined_call_operand.vmem [shape: f32[64,32], index: 7, kind: input, shape index: {}]
  %s8 = inlined_call_operand.vmem [shape: f32[1,32], index: 8, kind: input, shape index: {}]
  %s9 = inlined_call_operand.vmem [shape: f32[1,32], index: 9, kind: input, shape index: {}]
  %s10 = inlined_call_operand.vmem [shape: f32[1,32], index: 10, kind: input, shape index: {}]
  %s11 = inlined_call_operand.vmem [shape: f32[1,32], index: 11, kind: input, shape index: {}]
  %s12 = inlined_call_operand.vmem [shape: f32[1,32], index: 12, kind: input, shape index: {}]
  %s13 = inlined_call_operand.hbm [shape: f32[16,32], index: 13, kind: output, shape index: {0}]
  %s14 = inlined_call_operand.hbm [shape: f32[2,8,8], index: 14, kind: output, shape index: {1}]
  %15 = xla_tuple %s13, %s14
  %s16 = sld [smem:[#allocation0]]
  $region74: #{tpu_custom_call.1} parent=0
    _
  %s18 = ssub.s32 1, %s16
  %s19 = scalar_select 0, %s18, %s16
  $region1: #{tpu_custom_call.1} parent=0
    #allocation2 [shape = 'u8[8192]{0}', space=vmem, size = 0x2000, scoped, tag = 'input window, operand 0, single buffered']
    #allocation3 [shape = 's32[1]{0}', space=sflag, size = 0x4, scoped, tag = 'scoped memory for tpu_custom_call.1']
    #allocation4 [shape = 's32[1]{0}', space=sflag, size = 0x4, scoped, tag = 'scoped memory for tpu_custom_call.1']
    #allocation5 [shape = 'u8[8192]{0}', space=vmem, size = 0x2000, scoped, tag = 'output window, operand 0, single buffered']
    #allocation6 [shape = 'u8[8192]{0}', space=vmem, size = 0x2000, scoped, tag = 'output window, operand 1, single buffered']
    #allocation7 [shape = 's32[1]{0}', space=sflag, size = 0x4, scoped, tag = 'scoped memory for tpu_custom_call.1']
    %20 = vsyncpa [#allocation3], 0
    %21 = vsyncpa [#allocation4], 0
    %22 = vsyncpa [#allocation7], 0
    // Predicated region
    $region2: #{tpu_custom_call.1} parent=1 // pred_check
      _
    $region3: #{tpu_custom_call.1} parent=1 // pred_check_branch
      %24 = sbr.rel (0) target = $region5
    $region4: #{tpu_custom_call.1} parent=1 // pred_region
      %s26 = ssub.s32 256, 256
      %27 = vsyncadd [#allocation3], %s26
      %s28 = sshll.u32 [#allocation2], 4
      %s29 = int_to_ptr.vmem [resolvable:$true] %s28
      %34 = dma.hbm_to_vmem [thread:$0]  %s0, 256, %s29, [#allocation3], 128, 128, 8
    $region5: #{tpu_custom_call.1} parent=1 // pred_fallthru
      _
    // Predicated region
    $region6: #{tpu_custom_call.1} parent=1 // pred_check
      _
    $region7: #{tpu_custom_call.1} parent=1 // pred_check_branch
      %36 = sbr.rel (0) target = $region9
    $region8: #{tpu_custom_call.1} parent=1 // pred_region
      _
    $region9: #{tpu_custom_call.1} parent=1 // pred_fallthru
      _
    // Predicated region
    $region10: #{tpu_custom_call.1} parent=1 // pred_check
      _
    $region11: #{tpu_custom_call.1} parent=1 // pred_check_branch
      %38 = sbr.rel (0) target = $region13
    $region12: #{tpu_custom_call.1} parent=1 // pred_region
      _
    $region13: #{tpu_custom_call.1} parent=1 // pred_fallthru
      _
    // Predicated region
    $region14: #{tpu_custom_call.1} parent=1 // pred_check
      _
    $region15: #{tpu_custom_call.1} parent=1 // pred_check_branch
      %40 = sbr.rel (0) target = $region17
    $region16: #{tpu_custom_call.1} parent=1 // pred_region
      _
    $region17: #{tpu_custom_call.1} parent=1 // pred_fallthru
      _
    // Predicated region
    $region18: #{tpu_custom_call.1} parent=1 // pred_check
      _
    $region19: #{tpu_custom_call.1} parent=1 // pred_check_branch
      %42 = sbr.rel (0) target = $region21
    $region20: #{tpu_custom_call.1} parent=1 // pred_region
      _
    $region21: #{tpu_custom_call.1} parent=1 // pred_fallthru
      _
    // Predicated region
    $region22: #{tpu_custom_call.1} parent=1 // pred_check
      _
    $region23: #{tpu_custom_call.1} parent=1 // pred_check_branch
      %44 = sbr.rel (0) target = $region25
    $region24: #{tpu_custom_call.1} parent=1 // pred_region
      _
    $region25: #{tpu_custom_call.1} parent=1 // pred_fallthru
      _
    // Predicated region
    $region26: #{tpu_custom_call.1} parent=1 // pred_check
      _
    $region27: #{tpu_custom_call.1} parent=1 // pred_check_branch
      %46 = sbr.rel (0) target = $region29
    $region28: #{tpu_custom_call.1} parent=1 // pred_region
      _
    $region29: #{tpu_custom_call.1} parent=1 // pred_fallthru
      _
    // Predicated region
    $region30: #{tpu_custom_call.1} parent=1 // pred_check
      _
    $region31: #{tpu_custom_call.1} parent=1 // pred_check_branch
      %48 = sbr.rel (0) target = $region33
    $region32: #{tpu_custom_call.1} parent=1 // pred_region
      _
    $region33: #{tpu_custom_call.1} parent=1 // pred_fallthru
      _
    // Predicated region
    $region34: #{tpu_custom_call.1} parent=1 // pred_check
      _
    $region35: #{tpu_custom_call.1} parent=1 // pred_check_branch
      %50 = sbr.rel (0) target = $region37
    $region36: #{tpu_custom_call.1} parent=1 // pred_region
      _
    $region37: #{tpu_custom_call.1} parent=1 // pred_fallthru
      _
    // Predicated region
    $region38: #{tpu_custom_call.1} parent=1 // pred_check
      _
    $region39: #{tpu_custom_call.1} parent=1 // pred_check_branch
      %52 = sbr.rel (0) target = $region41
    $region40: #{tpu_custom_call.1} parent=1 // pred_region
      _
    $region41: #{tpu_custom_call.1} parent=1 // pred_fallthru
      _
    // Predicated region
    $region42: #{tpu_custom_call.1} parent=1 // pred_check
      _
    $region43: #{tpu_custom_call.1} parent=1 // pred_check_branch
      %54 = sbr.rel (0) target = $region45
    $region44: #{tpu_custom_call.1} parent=1 // pred_region
      _
    $region45: #{tpu_custom_call.1} parent=1 // pred_fallthru
      _
    // Predicated region
    $region46: #{tpu_custom_call.1} parent=1 // pred_check
      _
    $region47: #{tpu_custom_call.1} parent=1 // pred_check_branch
      %56 = sbr.rel (0) target = $region49
    $region48: #{tpu_custom_call.1} parent=1 // pred_region
      _
    $region49: #{tpu_custom_call.1} parent=1 // pred_fallthru
      _
    // Predicated region
    $region50: #{tpu_custom_call.1} parent=1 // pred_check
      _
    $region51: #{tpu_custom_call.1} parent=1 // pred_check_branch
      %58 = sbr.rel (0) target = $region53
    $region52: #{tpu_custom_call.1} parent=1 // pred_region
      _
    $region53: #{tpu_custom_call.1} parent=1 // pred_fallthru
      _
    // Predicated region
    $region54: #{tpu_custom_call.1} parent=1 // pred_check
      _
    $region55: #{tpu_custom_call.1} parent=1 // pred_check_branch
      %60 = sbr.rel (0) target = $region57
    $region56: #{tpu_custom_call.1} parent=1 // pred_region
      %61 = dma.done [#allocation3], 256
    $region57: #{tpu_custom_call.1} parent=1 // pred_fallthru
      _
    %v62 = vld [vmem:[#allocation2] sm:$0xff]
    %v63 = vld [vmem:[#allocation2 + $0x8] sm:$0xff]
    %v64 = vld [vmem:[%s3] sm:$0xff]
    %v65 = vld [vmem:[%s3 + $0x8] sm:$0xff]
    %v66 = vld [vmem:[%s3 + $0x10] sm:$0xff]
    %v67 = vld [vmem:[%s3 + $0x18] sm:$0xff]
    %v68 = vld [vmem:[%s1] sm:$0xff]
    %v69 = vld [vmem:[%s1 + $0x8] sm:$0xff]
    %v70 = vld [vmem:[%s1 + $0x10] sm:$0xff]
    %v71 = vld [vmem:[%s1 + $0x18] sm:$0xff]
    %v72 = vld [vmem:[%s2] sm:$0x1]
    %v74 = vlaneseq
    %v75 = vshrl.u32 %v74, 7
    %v76 = vsub.s32 0, %v75
    %v77 = vrot.slane %v72, %v76
    %vm79 = vcmask 261120
    %v81 = vsel %vm79, %v62, 0
    %v84 = vsel %vm79, %v63, 0
    %86 = vmatprep.subr.mxu0 0.0
    %87 = vmatpush1.msra.mxu0 %v68
    %88 = vmatprep.subr.mxu0 0.0
    %89 = vmatpush1.msra.mxu0 %v69
    %90 = vmatprep.subr.mxu0 0.0
    %91 = vmatpush1.msra.mxu0 %v70
    %92 = vmatprep.subr.mxu0 0.0
    %93 = vmatpush1.msra.mxu0 %v71
    %94 = vmatprep.subr.mxu0 0.0
    %95 = vmatpush1.msra.mxu0 0.0
    %96 = vmatprep.subr.mxu0 0.0
    %97 = vmatpush1.msra.mxu0 0.0
    %98 = vmatprep.subr.mxu0 0.0
    %99 = vmatpush1.msra.mxu0 0.0
    %100 = vmatprep.subr.mxu0 0.0
    %101 = vmatpush1.msra.mxu0 0.0
    %102 = vmatprep.subr.mxu0 0.0
    %103 = vmatpush1.msra.mxu0 0.0
    %104 = vmatprep.subr.mxu0 0.0
    %105 = vmatpush1.msra.mxu0 0.0
    %106 = vmatprep.subr.mxu0 0.0
    %107 = vmatpush1.msra.mxu0 0.0
    %108 = vmatprep.subr.mxu0 0.0
    %109 = vmatpush1.msra.mxu0 0.0
    %110 = vmatprep.subr.mxu0 0.0
    %111 = vmatpush1.msra.mxu0 0.0
    %112 = vmatprep.subr.mxu0 0.0
    %113 = vmatpush1.msra.mxu0 0.0
    %114 = vmatprep.subr.mxu0 0.0
    %115 = vmatpush1.msra.mxu0 0.0
    %116 = vmatprep.subr.mxu0 0.0
    %117 = vmatpush1.msra.mxu0 0.0
    %118 = vmatprep.subr.mxu0 0.0
    %119 = vmatpush1.msra.mxu0 0.0
    %120 = vmatprep.subr.mxu0 0.0
    %121 = vmatpush1.msra.mxu0 0.0
    %122 = vmatprep.subr.mxu0 0.0
    %123 = vmatpush1.msra.mxu0 0.0
    %124 = vmatprep.subr.mxu0 0.0
    %125 = vmatpush1.msra.mxu0 0.0
    %126 = vmatprep.subr.mxu0 0.0
    %127 = vmatpush1.msra.mxu0 0.0
    %128 = vmatprep.subr.mxu0 0.0
    %129 = vmatpush1.msra.mxu0 0.0
    %130 = vmatprep.subr.mxu0 0.0
    %131 = vmatpush1.msra.mxu0 0.0
    %132 = vmatprep.subr.mxu0 0.0
    %133 = vmatpush1.msra.mxu0 0.0
    %134 = vmatprep.subr.mxu0 0.0
    %135 = vmatpush1.msra.mxu0 0.0
    %136 = vmatprep.subr.mxu0 0.0
    %137 = vmatpush1.msra.mxu0 0.0
    %138 = vmatprep.subr.mxu0 0.0
    %139 = vmatpush1.msra.mxu0 0.0
    %140 = vmatprep.subr.mxu0 0.0
    %141 = vmatpush1.msra.mxu0 0.0
    %142 = vmatprep.subr.mxu0 0.0
    %143 = vmatpush1.msra.mxu0 0.0
    %144 = vmatprep.subr.mxu0 0.0
    %145 = vmatpush1.msra.mxu0 0.0
    %146 = vmatprep.subr.mxu0 0.0
    %147 = vmatpush1.msra.mxu0 0.0
    %148 = vmatprep.subr.mxu0 0.0
    %149 = vmatpush1.msra.mxu0 0.0
    %150 = vmatprep.mubr.f32.mxu0 0.0
    %151 = vmatmul.mubr.f32.gmra.mrb[0].mxu0 %v81
    %v152 = vpop.f32.mrb[0].mxu0
    %v153 = vadd.f32 %v77, %v152
    %v154 = vpop.f32.mrb[0].mxu0
    %155 = vmatprep.mubr.f32.mxu0 0.0
    %156 = vmatmul.mubr.f32.gmra.mrb[0].mxu0 %v84
    %v157 = vpop.f32.mrb[0].mxu0
    %v158 = vadd.f32 %v77, %v157
    %v159 = vpop.f32.mrb[0].mxu0
    %160 = vdwg.mxu0
    %v161 = vmul.f32 %v153, 0.35355338
    %v162 = vmul.f32 %v158, 0.35355338
    %164 = vrot.lane.b32.xlu0 %v153, 96
    %v165 = vpop.permute.xlu0 %164
    %vm166 = vcmask 64512
    %v168 = vsel %vm166, %v161, 0
    %v170 = vsel %vm166, %v165, 0
    %172 = vmatprep.subr.mxu0 0.0
    %173 = vmatpush1.xpose.msra.mxu0 %v170
    %174 = vmatprep.subr.mxu0 0.0
    %175 = vmatpush1.xpose.msra.mxu0 0.0
    %176 = vmatprep.subr.mxu0 0.0
    %177 = vmatpush1.xpose.msra.mxu0 0.0
    %178 = vmatprep.subr.mxu0 0.0
    %179 = vmatpush1.xpose.msra.mxu0 0.0
    %180 = vmatprep.subr.mxu0 0.0
    %181 = vmatpush1.xpose.msra.mxu0 0.0
    %182 = vmatprep.subr.mxu0 0.0
    %183 = vmatpush1.xpose.msra.mxu0 0.0
    %184 = vmatprep.subr.mxu0 0.0
    %185 = vmatpush1.xpose.msra.mxu0 0.0
    %186 = vmatprep.subr.mxu0 0.0
    %187 = vmatpush1.xpose.msra.mxu0 0.0
    %188 = vmatprep.subr.mxu0 0.0
    %189 = vmatpush1.xpose.msra.mxu0 0.0
    %190 = vmatprep.subr.mxu0 0.0
    %191 = vmatpush1.xpose.msra.mxu0 0.0
    %192 = vmatprep.subr.mxu0 0.0
    %193 = vmatpush1.xpose.msra.mxu0 0.0
    %194 = vmatprep.subr.mxu0 0.0
    %195 = vmatpush1.xpose.msra.mxu0 0.0
    %196 = vmatprep.subr.mxu0 0.0
    %197 = vmatpush1.xpose.msra.mxu0 0.0
    %198 = vmatprep.subr.mxu0 0.0
    %199 = vmatpush1.xpose.msra.mxu0 0.0
    %200 = vmatprep.subr.mxu0 0.0
    %201 = vmatpush1.xpose.msra.mxu0 0.0
    %202 = vmatprep.subr.mxu0 0.0
    %203 = vmatpush1.xpose.msra.mxu0 0.0
    %204 = vmatprep.subr.mxu0 0.0
    %205 = vmatpush1.xpose.msra.mxu0 0.0
    %206 = vmatprep.subr.mxu0 0.0
    %207 = vmatpush1.xpose.msra.mxu0 0.0
    %208 = vmatprep.subr.mxu0 0.0
    %209 = vmatpush1.xpose.msra.mxu0 0.0
    %210 = vmatprep.subr.mxu0 0.0
    %211 = vmatpush1.xpose.msra.mxu0 0.0
    %212 = vmatprep.subr.mxu0 0.0
    %213 = vmatpush1.xpose.msra.mxu0 0.0
    %214 = vmatprep.subr.mxu0 0.0
    %215 = vmatpush1.xpose.msra.mxu0 0.0
    %216 = vmatprep.subr.mxu0 0.0
    %217 = vmatpush1.xpose.msra.mxu0 0.0
    %218 = vmatprep.subr.mxu0 0.0
    %219 = vmatpush1.xpose.msra.mxu0 0.0
    %220 = vmatprep.subr.mxu0 0.0
    %221 = vmatpush1.xpose.msra.mxu0 0.0
    %222 = vmatprep.subr.mxu0 0.0
    %223 = vmatpush1.xpose.msra.mxu0 0.0
    %224 = vmatprep.subr.mxu0 0.0
    %225 = vmatpush1.xpose.msra.mxu0 0.0
    %226 = vmatprep.subr.mxu0 0.0
    %227 = vmatpush1.xpose.msra.mxu0 0.0
    %228 = vmatprep.subr.mxu0 0.0
    %229 = vmatpush1.xpose.msra.mxu0 0.0
    %230 = vmatprep.subr.mxu0 0.0
    %231 = vmatpush1.xpose.msra.mxu0 0.0
    %232 = vmatprep.subr.mxu0 0.0
    %233 = vmatpush1.xpose.msra.mxu0 0.0
    %234 = vmatprep.subr.mxu0 0.0
    %235 = vmatpush1.xpose.msra.mxu0 0.0
    %236 = vmatprep.mubr.f32.mxu0 0.0
    %237 = vmatmul.mubr.f32.gmra.mrb[0].mxu0 %v168
    %v238 = vpop.f32.mrb[0].mxu0
    %v239 = vadd.f32 0.0, %v238
    %v240 = vpop.f32.mrb[0].mxu0
    %241 = vdwg.mxu0
    %v242 = vsel %vm166, %v239, -inf
    %243 = vmax.xlane.f32.xlu0 %v242
    %v244 = vpop.xlane.xlu0 %243
    %v245 = vsub.f32 %v239, %v244
    %v246 = vmul.f32 %v245, 1.442695
    %v247 = vpow.pop %v246
    %v248 = vsel %vm166, %v247, 0.0
    %249 = vadd.xlane.f32.xlu0 %v248
    %v250 = vpop.xlane.xlu0 %249
    %v251 = vrcp.pop %v250
    %v252 = vmul.f32 %v247, %v251
    %253 = vrot.lane.b32.xlu0 %v153, 64
    %v254 = vpop.permute.xlu0 %253
    %v257 = vsel %vm166, %v252, 0
    %259 = vmatprep.subr.mxu0 0.0
    %260 = vmatpush1.msra.mxu0 %v254
    %261 = vmatprep.subr.mxu0 0.0
    %262 = vmatpush1.msra.mxu0 0.0
    %263 = vmatprep.subr.mxu0 0.0
    %264 = vmatpush1.msra.mxu0 0.0
    %265 = vmatprep.subr.mxu0 0.0
    %266 = vmatpush1.msra.mxu0 0.0
    %267 = vmatprep.subr.mxu0 0.0
    %268 = vmatpush1.msra.mxu0 0.0
    %269 = vmatprep.subr.mxu0 0.0
    %270 = vmatpush1.msra.mxu0 0.0
    %271 = vmatprep.subr.mxu0 0.0
    %272 = vmatpush1.msra.mxu0 0.0
    %273 = vmatprep.subr.mxu0 0.0
    %274 = vmatpush1.msra.mxu0 0.0
    %275 = vmatprep.subr.mxu0 0.0
    %276 = vmatpush1.msra.mxu0 0.0
    %277 = vmatprep.subr.mxu0 0.0
    %278 = vmatpush1.msra.mxu0 0.0
    %279 = vmatprep.subr.mxu0 0.0
    %280 = vmatpush1.msra.mxu0 0.0
    %281 = vmatprep.subr.mxu0 0.0
    %282 = vmatpush1.msra.mxu0 0.0
    %283 = vmatprep.subr.mxu0 0.0
    %284 = vmatpush1.msra.mxu0 0.0
    %285 = vmatprep.subr.mxu0 0.0
    %286 = vmatpush1.msra.mxu0 0.0
    %287 = vmatprep.subr.mxu0 0.0
    %288 = vmatpush1.msra.mxu0 0.0
    %289 = vmatprep.subr.mxu0 0.0
    %290 = vmatpush1.msra.mxu0 0.0
    %291 = vmatprep.subr.mxu0 0.0
    %292 = vmatpush1.msra.mxu0 0.0
    %293 = vmatprep.subr.mxu0 0.0
    %294 = vmatpush1.msra.mxu0 0.0
    %295 = vmatprep.subr.mxu0 0.0
    %296 = vmatpush1.msra.mxu0 0.0
    %297 = vmatprep.subr.mxu0 0.0
    %298 = vmatpush1.msra.mxu0 0.0
    %299 = vmatprep.subr.mxu0 0.0
    %300 = vmatpush1.msra.mxu0 0.0
    %301 = vmatprep.subr.mxu0 0.0
    %302 = vmatpush1.msra.mxu0 0.0
    %303 = vmatprep.subr.mxu0 0.0
    %304 = vmatpush1.msra.mxu0 0.0
    %305 = vmatprep.subr.mxu0 0.0
    %306 = vmatpush1.msra.mxu0 0.0
    %307 = vmatprep.subr.mxu0 0.0
    %308 = vmatpush1.msra.mxu0 0.0
    %309 = vmatprep.subr.mxu0 0.0
    %310 = vmatpush1.msra.mxu0 0.0
    %311 = vmatprep.subr.mxu0 0.0
    %312 = vmatpush1.msra.mxu0 0.0
    %313 = vmatprep.subr.mxu0 0.0
    %314 = vmatpush1.msra.mxu0 0.0
    %315 = vmatprep.subr.mxu0 0.0
    %316 = vmatpush1.msra.mxu0 0.0
    %317 = vmatprep.subr.mxu0 0.0
    %318 = vmatpush1.msra.mxu0 0.0
    %319 = vmatprep.subr.mxu0 0.0
    %320 = vmatpush1.msra.mxu0 0.0
    %321 = vmatprep.subr.mxu0 0.0
    %322 = vmatpush1.msra.mxu0 0.0
    %323 = vmatprep.mubr.f32.mxu0 0.0
    %324 = vmatmul.mubr.f32.gmra.mrb[0].mxu0 %v257
    %v325 = vpop.f32.mrb[0].mxu0
    %v326 = vadd.f32 0.0, %v325
    %v327 = vpop.f32.mrb[0].mxu0
    %328 = vdwg.mxu0
    %v329 = vadd.f32 %v252, 0.0
    %330 = vrot.lane.b32.xlu0 %v161, 120
    %v331 = vpop.permute.xlu0 %330
    %332 = vrot.lane.b32.xlu0 %v153, 88
    %v333 = vpop.permute.xlu0 %332
    %v334 = vsel %vm166, %v331, 0
    %v336 = vsel %vm166, %v333, 0
    %338 = vmatprep.subr.mxu0 0.0
    %339 = vmatpush1.xpose.msra.mxu0 %v336
    %340 = vmatprep.subr.mxu0 0.0
    %341 = vmatpush1.xpose.msra.mxu0 0.0
    %342 = vmatprep.subr.mxu0 0.0
    %343 = vmatpush1.xpose.msra.mxu0 0.0
    %344 = vmatprep.subr.mxu0 0.0
    %345 = vmatpush1.xpose.msra.mxu0 0.0
    %346 = vmatprep.subr.mxu0 0.0
    %347 = vmatpush1.xpose.msra.mxu0 0.0
    %348 = vmatprep.subr.mxu0 0.0
    %349 = vmatpush1.xpose.msra.mxu0 0.0
    %350 = vmatprep.subr.mxu0 0.0
    %351 = vmatpush1.xpose.msra.mxu0 0.0
    %352 = vmatprep.subr.mxu0 0.0
    %353 = vmatpush1.xpose.msra.mxu0 0.0
    %354 = vmatprep.subr.mxu0 0.0
    %355 = vmatpush1.xpose.msra.mxu0 0.0
    %356 = vmatprep.subr.mxu0 0.0
    %357 = vmatpush1.xpose.msra.mxu0 0.0
    %358 = vmatprep.subr.mxu0 0.0
    %359 = vmatpush1.xpose.msra.mxu0 0.0
    %360 = vmatprep.subr.mxu0 0.0
    %361 = vmatpush1.xpose.msra.mxu0 0.0
    %362 = vmatprep.subr.mxu0 0.0
    %363 = vmatpush1.xpose.msra.mxu0 0.0
    %364 = vmatprep.subr.mxu0 0.0
    %365 = vmatpush1.xpose.msra.mxu0 0.0
    %366 = vmatprep.subr.mxu0 0.0
    %367 = vmatpush1.xpose.msra.mxu0 0.0
    %368 = vmatprep.subr.mxu0 0.0
    %369 = vmatpush1.xpose.msra.mxu0 0.0
    %370 = vmatprep.subr.mxu0 0.0
    %371 = vmatpush1.xpose.msra.mxu0 0.0
    %372 = vmatprep.subr.mxu0 0.0
    %373 = vmatpush1.xpose.msra.mxu0 0.0
    %374 = vmatprep.subr.mxu0 0.0
    %375 = vmatpush1.xpose.msra.mxu0 0.0
    %376 = vmatprep.subr.mxu0 0.0
    %377 = vmatpush1.xpose.msra.mxu0 0.0
    %378 = vmatprep.subr.mxu0 0.0
    %379 = vmatpush1.xpose.msra.mxu0 0.0
    %380 = vmatprep.subr.mxu0 0.0
    %381 = vmatpush1.xpose.msra.mxu0 0.0
    %382 = vmatprep.subr.mxu0 0.0
    %383 = vmatpush1.xpose.msra.mxu0 0.0
    %384 = vmatprep.subr.mxu0 0.0
    %385 = vmatpush1.xpose.msra.mxu0 0.0
    %386 = vmatprep.subr.mxu0 0.0
    %387 = vmatpush1.xpose.msra.mxu0 0.0
    %388 = vmatprep.subr.mxu0 0.0
    %389 = vmatpush1.xpose.msra.mxu0 0.0
    %390 = vmatprep.subr.mxu0 0.0
    %391 = vmatpush1.xpose.msra.mxu0 0.0
    %392 = vmatprep.subr.mxu0 0.0
    %393 = vmatpush1.xpose.msra.mxu0 0.0
    %394 = vmatprep.subr.mxu0 0.0
    %395 = vmatpush1.xpose.msra.mxu0 0.0
    %396 = vmatprep.subr.mxu0 0.0
    %397 = vmatpush1.xpose.msra.mxu0 0.0
    %398 = vmatprep.subr.mxu0 0.0
    %399 = vmatpush1.xpose.msra.mxu0 0.0
    %400 = vmatprep.subr.mxu0 0.0
    %401 = vmatpush1.xpose.msra.mxu0 0.0
    %402 = vmatprep.mubr.f32.mxu0 0.0
    %403 = vmatmul.mubr.f32.gmra.mrb[0].mxu0 %v334
    %v404 = vpop.f32.mrb[0].mxu0
    %v405 = vadd.f32 0.0, %v404
    %v406 = vpop.f32.mrb[0].mxu0
    %407 = vdwg.mxu0
    %v408 = vsel %vm166, %v405, -inf
    %409 = vmax.xlane.f32.xlu0 %v408
    %v410 = vpop.xlane.xlu0 %409
    %v411 = vsub.f32 %v405, %v410
    %v412 = vmul.f32 %v411, 1.442695
    %v413 = vpow.pop %v412
    %v414 = vsel %vm166, %v413, 0.0
    %415 = vadd.xlane.f32.xlu0 %v414
    %v416 = vpop.xlane.xlu0 %415
    %v417 = vrcp.pop %v416
    %v418 = vmul.f32 %v413, %v417
    %419 = vrot.lane.b32.xlu0 %v153, 56
    %v420 = vpop.permute.xlu0 %419
    %v423 = vsel %vm166, %v418, 0
    %425 = vmatprep.subr.mxu0 0.0
    %426 = vmatpush1.msra.mxu0 %v420
    %427 = vmatprep.subr.mxu0 0.0
    %428 = vmatpush1.msra.mxu0 0.0
    %429 = vmatprep.subr.mxu0 0.0
    %430 = vmatpush1.msra.mxu0 0.0
    %431 = vmatprep.subr.mxu0 0.0
    %432 = vmatpush1.msra.mxu0 0.0
    %433 = vmatprep.subr.mxu0 0.0
    %434 = vmatpush1.msra.mxu0 0.0
    %435 = vmatprep.subr.mxu0 0.0
    %436 = vmatpush1.msra.mxu0 0.0
    %437 = vmatprep.subr.mxu0 0.0
    %438 = vmatpush1.msra.mxu0 0.0
    %439 = vmatprep.subr.mxu0 0.0
    %440 = vmatpush1.msra.mxu0 0.0
    %441 = vmatprep.subr.mxu0 0.0
    %442 = vmatpush1.msra.mxu0 0.0
    %443 = vmatprep.subr.mxu0 0.0
    %444 = vmatpush1.msra.mxu0 0.0
    %445 = vmatprep.subr.mxu0 0.0
    %446 = vmatpush1.msra.mxu0 0.0
    %447 = vmatprep.subr.mxu0 0.0
    %448 = vmatpush1.msra.mxu0 0.0
    %449 = vmatprep.subr.mxu0 0.0
    %450 = vmatpush1.msra.mxu0 0.0
    %451 = vmatprep.subr.mxu0 0.0
    %452 = vmatpush1.msra.mxu0 0.0
    %453 = vmatprep.subr.mxu0 0.0
    %454 = vmatpush1.msra.mxu0 0.0
    %455 = vmatprep.subr.mxu0 0.0
    %456 = vmatpush1.msra.mxu0 0.0
    %457 = vmatprep.subr.mxu0 0.0
    %458 = vmatpush1.msra.mxu0 0.0
    %459 = vmatprep.subr.mxu0 0.0
    %460 = vmatpush1.msra.mxu0 0.0
    %461 = vmatprep.subr.mxu0 0.0
    %462 = vmatpush1.msra.mxu0 0.0
    %463 = vmatprep.subr.mxu0 0.0
    %464 = vmatpush1.msra.mxu0 0.0
    %465 = vmatprep.subr.mxu0 0.0
    %466 = vmatpush1.msra.mxu0 0.0
    %467 = vmatprep.subr.mxu0 0.0
    %468 = vmatpush1.msra.mxu0 0.0
    %469 = vmatprep.subr.mxu0 0.0
    %470 = vmatpush1.msra.mxu0 0.0
    %471 = vmatprep.subr.mxu0 0.0
    %472 = vmatpush1.msra.mxu0 0.0
    %473 = vmatprep.subr.mxu0 0.0
    %474 = vmatpush1.msra.mxu0 0.0
    %475 = vmatprep.subr.mxu0 0.0
    %476 = vmatpush1.msra.mxu0 0.0
    %477 = vmatprep.subr.mxu0 0.0
    %478 = vmatpush1.msra.mxu0 0.0
    %479 = vmatprep.subr.mxu0 0.0
    %480 = vmatpush1.msra.mxu0 0.0
    %481 = vmatprep.subr.mxu0 0.0
    %482 = vmatpush1.msra.mxu0 0.0
    %483 = vmatprep.subr.mxu0 0.0
    %484 = vmatpush1.msra.mxu0 0.0
    %485 = vmatprep.subr.mxu0 0.0
    %486 = vmatpush1.msra.mxu0 0.0
    %487 = vmatprep.subr.mxu0 0.0
    %488 = vmatpush1.msra.mxu0 0.0
    %489 = vmatprep.mubr.f32.mxu0 0.0
    %490 = vmatmul.mubr.f32.gmra.mrb[0].mxu0 %v423
    %v491 = vpop.f32.mrb[0].mxu0
    %v492 = vadd.f32 0.0, %v491
    %v493 = vpop.f32.mrb[0].mxu0
    %494 = vdwg.mxu0
    %v496 = vsel %vm166, %v492, 0
    %498 = vmatprep.subr.mxu0 0.0
    %499 = vmatpush1.msra.mxu0 %v65
    %500 = vmatprep.subr.mxu0 0.0
    %501 = vmatpush1.msra.mxu0 0.0
    %502 = vmatprep.subr.mxu0 0.0
    %503 = vmatpush1.msra.mxu0 0.0
    %504 = vmatprep.subr.mxu0 0.0
    %505 = vmatpush1.msra.mxu0 0.0
    %506 = vmatprep.subr.mxu0 0.0
    %507 = vmatpush1.msra.mxu0 0.0
    %508 = vmatprep.subr.mxu0 0.0
    %509 = vmatpush1.msra.mxu0 0.0
    %510 = vmatprep.subr.mxu0 0.0
    %511 = vmatpush1.msra.mxu0 0.0
    %512 = vmatprep.subr.mxu0 0.0
    %513 = vmatpush1.msra.mxu0 0.0
    %514 = vmatprep.subr.mxu0 0.0
    %515 = vmatpush1.msra.mxu0 0.0
    %516 = vmatprep.subr.mxu0 0.0
    %517 = vmatpush1.msra.mxu0 0.0
    %518 = vmatprep.subr.mxu0 0.0
    %519 = vmatpush1.msra.mxu0 0.0
    %520 = vmatprep.subr.mxu0 0.0
    %521 = vmatpush1.msra.mxu0 0.0
    %522 = vmatprep.subr.mxu0 0.0
    %523 = vmatpush1.msra.mxu0 0.0
    %524 = vmatprep.subr.mxu0 0.0
    %525 = vmatpush1.msra.mxu0 0.0
    %526 = vmatprep.subr.mxu0 0.0
    %527 = vmatpush1.msra.mxu0 0.0
    %528 = vmatprep.subr.mxu0 0.0
    %529 = vmatpush1.msra.mxu0 0.0
    %530 = vmatprep.subr.mxu0 0.0
    %531 = vmatpush1.msra.mxu0 0.0
    %532 = vmatprep.subr.mxu0 0.0
    %533 = vmatpush1.msra.mxu0 0.0
    %534 = vmatprep.subr.mxu0 0.0
    %535 = vmatpush1.msra.mxu0 0.0
    %536 = vmatprep.subr.mxu0 0.0
    %537 = vmatpush1.msra.mxu0 0.0
    %538 = vmatprep.subr.mxu0 0.0
    %539 = vmatpush1.msra.mxu0 0.0
    %540 = vmatprep.subr.mxu0 0.0
    %541 = vmatpush1.msra.mxu0 0.0
    %542 = vmatprep.subr.mxu0 0.0
    %543 = vmatpush1.msra.mxu0 0.0
    %544 = vmatprep.subr.mxu0 0.0
    %545 = vmatpush1.msra.mxu0 0.0
    %546 = vmatprep.subr.mxu0 0.0
    %547 = vmatpush1.msra.mxu0 0.0
    %548 = vmatprep.subr.mxu0 0.0
    %549 = vmatpush1.msra.mxu0 0.0
    %550 = vmatprep.subr.mxu0 0.0
    %551 = vmatpush1.msra.mxu0 0.0
    %552 = vmatprep.subr.mxu0 0.0
    %553 = vmatpush1.msra.mxu0 0.0
    %554 = vmatprep.subr.mxu0 0.0
    %555 = vmatpush1.msra.mxu0 0.0
    %556 = vmatprep.subr.mxu0 0.0
    %557 = vmatpush1.msra.mxu0 0.0
    %558 = vmatprep.subr.mxu0 0.0
    %559 = vmatpush1.msra.mxu0 0.0
    %560 = vmatprep.subr.mxu0 0.0
    %561 = vmatpush1.msra.mxu0 0.0
    %562 = vmatprep.mubr.f32.mxu0 0.0
    %563 = vmatmul.mubr.f32.gmra.mrb[0].mxu0 %v496
    %v564 = vpop.f32.mrb[0].mxu0
    %v565 = vadd.f32 0.0, %v564
    %v566 = vpop.f32.mrb[0].mxu0
    %567 = vdwg.mxu0
    %v569 = vsel %vm166, %v326, 0
    %571 = vmatprep.subr.mxu0 0.0
    %572 = vmatpush1.msra.mxu0 %v64
    %573 = vmatprep.subr.mxu0 0.0
    %574 = vmatpush1.msra.mxu0 0.0
    %575 = vmatprep.subr.mxu0 0.0
    %576 = vmatpush1.msra.mxu0 0.0
    %577 = vmatprep.subr.mxu0 0.0
    %578 = vmatpush1.msra.mxu0 0.0
    %579 = vmatprep.subr.mxu0 0.0
    %580 = vmatpush1.msra.mxu0 0.0
    %581 = vmatprep.subr.mxu0 0.0
    %582 = vmatpush1.msra.mxu0 0.0
    %583 = vmatprep.subr.mxu0 0.0
    %584 = vmatpush1.msra.mxu0 0.0
    %585 = vmatprep.subr.mxu0 0.0
    %586 = vmatpush1.msra.mxu0 0.0
    %587 = vmatprep.subr.mxu0 0.0
    %588 = vmatpush1.msra.mxu0 0.0
    %589 = vmatprep.subr.mxu0 0.0
    %590 = vmatpush1.msra.mxu0 0.0
    %591 = vmatprep.subr.mxu0 0.0
    %592 = vmatpush1.msra.mxu0 0.0
    %593 = vmatprep.subr.mxu0 0.0
    %594 = vmatpush1.msra.mxu0 0.0
    %595 = vmatprep.subr.mxu0 0.0
    %596 = vmatpush1.msra.mxu0 0.0
    %597 = vmatprep.subr.mxu0 0.0
    %598 = vmatpush1.msra.mxu0 0.0
    %599 = vmatprep.subr.mxu0 0.0
    %600 = vmatpush1.msra.mxu0 0.0
    %601 = vmatprep.subr.mxu0 0.0
    %602 = vmatpush1.msra.mxu0 0.0
    %603 = vmatprep.subr.mxu0 0.0
    %604 = vmatpush1.msra.mxu0 0.0
    %605 = vmatprep.subr.mxu0 0.0
    %606 = vmatpush1.msra.mxu0 0.0
    %607 = vmatprep.subr.mxu0 0.0
    %608 = vmatpush1.msra.mxu0 0.0
    %609 = vmatprep.subr.mxu0 0.0
    %610 = vmatpush1.msra.mxu0 0.0
    %611 = vmatprep.subr.mxu0 0.0
    %612 = vmatpush1.msra.mxu0 0.0
    %613 = vmatprep.subr.mxu0 0.0
    %614 = vmatpush1.msra.mxu0 0.0
    %615 = vmatprep.subr.mxu0 0.0
    %616 = vmatpush1.msra.mxu0 0.0
    %617 = vmatprep.subr.mxu0 0.0
    %618 = vmatpush1.msra.mxu0 0.0
    %619 = vmatprep.subr.mxu0 0.0
    %620 = vmatpush1.msra.mxu0 0.0
    %621 = vmatprep.subr.mxu0 0.0
    %622 = vmatpush1.msra.mxu0 0.0
    %623 = vmatprep.subr.mxu0 0.0
    %624 = vmatpush1.msra.mxu0 0.0
    %625 = vmatprep.subr.mxu0 0.0
    %626 = vmatpush1.msra.mxu0 0.0
    %627 = vmatprep.subr.mxu0 0.0
    %628 = vmatpush1.msra.mxu0 0.0
    %629 = vmatprep.subr.mxu0 0.0
    %630 = vmatpush1.msra.mxu0 0.0
    %631 = vmatprep.subr.mxu0 0.0
    %632 = vmatpush1.msra.mxu0 0.0
    %633 = vmatprep.subr.mxu0 0.0
    %634 = vmatpush1.msra.mxu0 0.0
    %635 = vmatprep.mubr.f32.mxu0 0.0
    %636 = vmatmul.mubr.f32.gmra.mrb[0].mxu0 %v569
    %v637 = vpop.f32.mrb[0].mxu0
    %v638 = vadd.f32 %v565, %v637
    %v639 = vpop.f32.mrb[0].mxu0
    %640 = vdwg.mxu0
    %v641 = vadd.f32 %v329, %v418
    %642 = vrot.lane.b32.xlu0 %v161, 112
    %v643 = vpop.permute.xlu0 %642
    %644 = vrot.lane.b32.xlu0 %v153, 80
    %v645 = vpop.permute.xlu0 %644
    %v646 = vsel %vm166, %v643, 0
    %v648 = vsel %vm166, %v645, 0
    %650 = vmatprep.subr.mxu0 0.0
    %651 = vmatpush1.xpose.msra.mxu0 %v648
    %652 = vmatprep.subr.mxu0 0.0
    %653 = vmatpush1.xpose.msra.mxu0 0.0
    %654 = vmatprep.subr.mxu0 0.0
    %655 = vmatpush1.xpose.msra.mxu0 0.0
    %656 = vmatprep.subr.mxu0 0.0
    %657 = vmatpush1.xpose.msra.mxu0 0.0
    %658 = vmatprep.subr.mxu0 0.0
    %659 = vmatpush1.xpose.msra.mxu0 0.0
    %660 = vmatprep.subr.mxu0 0.0
    %661 = vmatpush1.xpose.msra.mxu0 0.0
    %662 = vmatprep.subr.mxu0 0.0
    %663 = vmatpush1.xpose.msra.mxu0 0.0
    %664 = vmatprep.subr.mxu0 0.0
    %665 = vmatpush1.xpose.msra.mxu0 0.0
    %666 = vmatprep.subr.mxu0 0.0
    %667 = vmatpush1.xpose.msra.mxu0 0.0
    %668 = vmatprep.subr.mxu0 0.0
    %669 = vmatpush1.xpose.msra.mxu0 0.0
    %670 = vmatprep.subr.mxu0 0.0
    %671 = vmatpush1.xpose.msra.mxu0 0.0
    %672 = vmatprep.subr.mxu0 0.0
    %673 = vmatpush1.xpose.msra.mxu0 0.0
    %674 = vmatprep.subr.mxu0 0.0
    %675 = vmatpush1.xpose.msra.mxu0 0.0
    %676 = vmatprep.subr.mxu0 0.0
    %677 = vmatpush1.xpose.msra.mxu0 0.0
    %678 = vmatprep.subr.mxu0 0.0
    %679 = vmatpush1.xpose.msra.mxu0 0.0
    %680 = vmatprep.subr.mxu0 0.0
    %681 = vmatpush1.xpose.msra.mxu0 0.0
    %682 = vmatprep.subr.mxu0 0.0
    %683 = vmatpush1.xpose.msra.mxu0 0.0
    %684 = vmatprep.subr.mxu0 0.0
    %685 = vmatpush1.xpose.msra.mxu0 0.0
    %686 = vmatprep.subr.mxu0 0.0
    %687 = vmatpush1.xpose.msra.mxu0 0.0
    %688 = vmatprep.subr.mxu0 0.0
    %689 = vmatpush1.xpose.msra.mxu0 0.0
    %690 = vmatprep.subr.mxu0 0.0
    %691 = vmatpush1.xpose.msra.mxu0 0.0
    %692 = vmatprep.subr.mxu0 0.0
    %693 = vmatpush1.xpose.msra.mxu0 0.0
    %694 = vmatprep.subr.mxu0 0.0
    %695 = vmatpush1.xpose.msra.mxu0 0.0
    %696 = vmatprep.subr.mxu0 0.0
    %697 = vmatpush1.xpose.msra.mxu0 0.0
    %698 = vmatprep.subr.mxu0 0.0
    %699 = vmatpush1.xpose.msra.mxu0 0.0
    %700 = vmatprep.subr.mxu0 0.0
    %701 = vmatpush1.xpose.msra.mxu0 0.0
    %702 = vmatprep.subr.mxu0 0.0
    %703 = vmatpush1.xpose.msra.mxu0 0.0
    %704 = vmatprep.subr.mxu0 0.0
    %705 = vmatpush1.xpose.msra.mxu0 0.0
    %706 = vmatprep.subr.mxu0 0.0
    %707 = vmatpush1.xpose.msra.mxu0 0.0
    %708 = vmatprep.subr.mxu0 0.0
    %709 = vmatpush1.xpose.msra.mxu0 0.0
    %710 = vmatprep.subr.mxu0 0.0
    %711 = vmatpush1.xpose.msra.mxu0 0.0
    %712 = vmatprep.subr.mxu0 0.0
    %713 = vmatpush1.xpose.msra.mxu0 0.0
    %714 = vmatprep.mubr.f32.mxu0 0.0
    %715 = vmatmul.mubr.f32.gmra.mrb[0].mxu0 %v646
    %v716 = vpop.f32.mrb[0].mxu0
    %v717 = vadd.f32 0.0, %v716
    %v718 = vpop.f32.mrb[0].mxu0
    %719 = vdwg.mxu0
    %v720 = vsel %vm166, %v717, -inf
    %721 = vmax.xlane.f32.xlu0 %v720
    %v722 = vpop.xlane.xlu0 %721
    %v723 = vsub.f32 %v717, %v722
    %v724 = vmul.f32 %v723, 1.442695
    %v725 = vpow.pop %v724
    %v726 = vsel %vm166, %v725, 0.0
    %727 = vadd.xlane.f32.xlu0 %v726
    %v728 = vpop.xlane.xlu0 %727
    %v729 = vrcp.pop %v728
    %v730 = vmul.f32 %v725, %v729
    %731 = vrot.lane.b32.xlu0 %v153, 48
    %v732 = vpop.permute.xlu0 %731
    %v735 = vsel %vm166, %v730, 0
    %737 = vmatprep.subr.mxu0 0.0
    %738 = vmatpush1.msra.mxu0 %v732
    %739 = vmatprep.subr.mxu0 0.0
    %740 = vmatpush1.msra.mxu0 0.0
    %741 = vmatprep.subr.mxu0 0.0
    %742 = vmatpush1.msra.mxu0 0.0
    %743 = vmatprep.subr.mxu0 0.0
    %744 = vmatpush1.msra.mxu0 0.0
    %745 = vmatprep.subr.mxu0 0.0
    %746 = vmatpush1.msra.mxu0 0.0
    %747 = vmatprep.subr.mxu0 0.0
    %748 = vmatpush1.msra.mxu0 0.0
    %749 = vmatprep.subr.mxu0 0.0
    %750 = vmatpush1.msra.mxu0 0.0
    %751 = vmatprep.subr.mxu0 0.0
    %752 = vmatpush1.msra.mxu0 0.0
    %753 = vmatprep.subr.mxu0 0.0
    %754 = vmatpush1.msra.mxu0 0.0
    %755 = vmatprep.subr.mxu0 0.0
    %756 = vmatpush1.msra.mxu0 0.0
    %757 = vmatprep.subr.mxu0 0.0
    %758 = vmatpush1.msra.mxu0 0.0
    %759 = vmatprep.subr.mxu0 0.0
    %760 = vmatpush1.msra.mxu0 0.0
    %761 = vmatprep.subr.mxu0 0.0
    %762 = vmatpush1.msra.mxu0 0.0
    %763 = vmatprep.subr.mxu0 0.0
    %764 = vmatpush1.msra.mxu0 0.0
    %765 = vmatprep.subr.mxu0 0.0
    %766 = vmatpush1.msra.mxu0 0.0
    %767 = vmatprep.subr.mxu0 0.0
    %768 = vmatpush1.msra.mxu0 0.0
    %769 = vmatprep.subr.mxu0 0.0
    %770 = vmatpush1.msra.mxu0 0.0
    %771 = vmatprep.subr.mxu0 0.0
    %772 = vmatpush1.msra.mxu0 0.0
    %773 = vmatprep.subr.mxu0 0.0
    %774 = vmatpush1.msra.mxu0 0.0
    %775 = vmatprep.subr.mxu0 0.0
    %776 = vmatpush1.msra.mxu0 0.0
    %777 = vmatprep.subr.mxu0 0.0
    %778 = vmatpush1.msra.mxu0 0.0
    %779 = vmatprep.subr.mxu0 0.0
    %780 = vmatpush1.msra.mxu0 0.0
    %781 = vmatprep.subr.mxu0 0.0
    %782 = vmatpush1.msra.mxu0 0.0
    %783 = vmatprep.subr.mxu0 0.0
    %784 = vmatpush1.msra.mxu0 0.0
    %785 = vmatprep.subr.mxu0 0.0
    %786 = vmatpush1.msra.mxu0 0.0
    %787 = vmatprep.subr.mxu0 0.0
    %788 = vmatpush1.msra.mxu0 0.0
    %789 = vmatprep.subr.mxu0 0.0
    %790 = vmatpush1.msra.mxu0 0.0
    %791 = vmatprep.subr.mxu0 0.0
    %792 = vmatpush1.msra.mxu0 0.0
    %793 = vmatprep.subr.mxu0 0.0
    %794 = vmatpush1.msra.mxu0 0.0
    %795 = vmatprep.subr.mxu0 0.0
    %796 = vmatpush1.msra.mxu0 0.0
    %797 = vmatprep.subr.mxu0 0.0
    %798 = vmatpush1.msra.mxu0 0.0
    %799 = vmatprep.subr.mxu0 0.0
    %800 = vmatpush1.msra.mxu0 0.0
    %801 = vmatprep.mubr.f32.mxu0 0.0
    %802 = vmatmul.mubr.f32.gmra.mrb[0].mxu0 %v735
    %v803 = vpop.f32.mrb[0].mxu0
    %v804 = vadd.f32 0.0, %v803
    %v805 = vpop.f32.mrb[0].mxu0
    %806 = vdwg.mxu0
    %v808 = vsel %vm166, %v804, 0
    %810 = vmatprep.subr.mxu0 0.0
    %811 = vmatpush1.msra.mxu0 %v66
    %812 = vmatprep.subr.mxu0 0.0
    %813 = vmatpush1.msra.mxu0 0.0
    %814 = vmatprep.subr.mxu0 0.0
    %815 = vmatpush1.msra.mxu0 0.0
    %816 = vmatprep.subr.mxu0 0.0
    %817 = vmatpush1.msra.mxu0 0.0
    %818 = vmatprep.subr.mxu0 0.0
    %819 = vmatpush1.msra.mxu0 0.0
    %820 = vmatprep.subr.mxu0 0.0
    %821 = vmatpush1.msra.mxu0 0.0
    %822 = vmatprep.subr.mxu0 0.0
    %823 = vmatpush1.msra.mxu0 0.0
    %824 = vmatprep.subr.mxu0 0.0
    %825 = vmatpush1.msra.mxu0 0.0
    %826 = vmatprep.subr.mxu0 0.0
    %827 = vmatpush1.msra.mxu0 0.0
    %828 = vmatprep.subr.mxu0 0.0
    %829 = vmatpush1.msra.mxu0 0.0
    %830 = vmatprep.subr.mxu0 0.0
    %831 = vmatpush1.msra.mxu0 0.0
    %832 = vmatprep.subr.mxu0 0.0
    %833 = vmatpush1.msra.mxu0 0.0
    %834 = vmatprep.subr.mxu0 0.0
    %835 = vmatpush1.msra.mxu0 0.0
    %836 = vmatprep.subr.mxu0 0.0
    %837 = vmatpush1.msra.mxu0 0.0
    %838 = vmatprep.subr.mxu0 0.0
    %839 = vmatpush1.msra.mxu0 0.0
    %840 = vmatprep.subr.mxu0 0.0
    %841 = vmatpush1.msra.mxu0 0.0
    %842 = vmatprep.subr.mxu0 0.0
    %843 = vmatpush1.msra.mxu0 0.0
    %844 = vmatprep.subr.mxu0 0.0
    %845 = vmatpush1.msra.mxu0 0.0
    %846 = vmatprep.subr.mxu0 0.0
    %847 = vmatpush1.msra.mxu0 0.0
    %848 = vmatprep.subr.mxu0 0.0
    %849 = vmatpush1.msra.mxu0 0.0
    %850 = vmatprep.subr.mxu0 0.0
    %851 = vmatpush1.msra.mxu0 0.0
    %852 = vmatprep.subr.mxu0 0.0
    %853 = vmatpush1.msra.mxu0 0.0
    %854 = vmatprep.subr.mxu0 0.0
    %855 = vmatpush1.msra.mxu0 0.0
    %856 = vmatprep.subr.mxu0 0.0
    %857 = vmatpush1.msra.mxu0 0.0
    %858 = vmatprep.subr.mxu0 0.0
    %859 = vmatpush1.msra.mxu0 0.0
    %860 = vmatprep.subr.mxu0 0.0
    %861 = vmatpush1.msra.mxu0 0.0
    %862 = vmatprep.subr.mxu0 0.0
    %863 = vmatpush1.msra.mxu0 0.0
    %864 = vmatprep.subr.mxu0 0.0
    %865 = vmatpush1.msra.mxu0 0.0
    %866 = vmatprep.subr.mxu0 0.0
    %867 = vmatpush1.msra.mxu0 0.0
    %868 = vmatprep.subr.mxu0 0.0
    %869 = vmatpush1.msra.mxu0 0.0
    %870 = vmatprep.subr.mxu0 0.0
    %871 = vmatpush1.msra.mxu0 0.0
    %872 = vmatprep.subr.mxu0 0.0
    %873 = vmatpush1.msra.mxu0 0.0
    %874 = vmatprep.mubr.f32.mxu0 0.0
    %875 = vmatmul.mubr.f32.gmra.mrb[0].mxu0 %v808
    %v876 = vpop.f32.mrb[0].mxu0
    %v877 = vadd.f32 0.0, %v876
    %v878 = vpop.f32.mrb[0].mxu0
    %879 = vdwg.mxu0
    %v880 = vadd.f32 %v638, %v877
    %v881 = vadd.f32 %v641, %v730
    %882 = vrot.lane.b32.xlu0 %v161, 104
    %v883 = vpop.permute.xlu0 %882
    %884 = vrot.lane.b32.xlu0 %v153, 72
    %v885 = vpop.permute.xlu0 %884
    %v886 = vsel %vm166, %v883, 0
    %v888 = vsel %vm166, %v885, 0
    %890 = vmatprep.subr.mxu0 0.0
    %891 = vmatpush1.xpose.msra.mxu0 %v888
    %892 = vmatprep.subr.mxu0 0.0
    %893 = vmatpush1.xpose.msra.mxu0 0.0
    %894 = vmatprep.subr.mxu0 0.0
    %895 = vmatpush1.xpose.msra.mxu0 0.0
    %896 = vmatprep.subr.mxu0 0.0
    %897 = vmatpush1.xpose.msra.mxu0 0.0
    %898 = vmatprep.subr.mxu0 0.0
    %899 = vmatpush1.xpose.msra.mxu0 0.0
    %900 = vmatprep.subr.mxu0 0.0
    %901 = vmatpush1.xpose.msra.mxu0 0.0
    %902 = vmatprep.subr.mxu0 0.0
    %903 = vmatpush1.xpose.msra.mxu0 0.0
    %904 = vmatprep.subr.mxu0 0.0
    %905 = vmatpush1.xpose.msra.mxu0 0.0
    %906 = vmatprep.subr.mxu0 0.0
    %907 = vmatpush1.xpose.msra.mxu0 0.0
    %908 = vmatprep.subr.mxu0 0.0
    %909 = vmatpush1.xpose.msra.mxu0 0.0
    %910 = vmatprep.subr.mxu0 0.0
    %911 = vmatpush1.xpose.msra.mxu0 0.0
    %912 = vmatprep.subr.mxu0 0.0
    %913 = vmatpush1.xpose.msra.mxu0 0.0
    %914 = vmatprep.subr.mxu0 0.0
    %915 = vmatpush1.xpose.msra.mxu0 0.0
    %916 = vmatprep.subr.mxu0 0.0
    %917 = vmatpush1.xpose.msra.mxu0 0.0
    %918 = vmatprep.subr.mxu0 0.0
    %919 = vmatpush1.xpose.msra.mxu0 0.0
    %920 = vmatprep.subr.mxu0 0.0
    %921 = vmatpush1.xpose.msra.mxu0 0.0
    %922 = vmatprep.subr.mxu0 0.0
    %923 = vmatpush1.xpose.msra.mxu0 0.0
    %924 = vmatprep.subr.mxu0 0.0
    %925 = vmatpush1.xpose.msra.mxu0 0.0
    %926 = vmatprep.subr.mxu0 0.0
    %927 = vmatpush1.xpose.msra.mxu0 0.0
    %928 = vmatprep.subr.mxu0 0.0
    %929 = vmatpush1.xpose.msra.mxu0 0.0
    %930 = vmatprep.subr.mxu0 0.0
    %931 = vmatpush1.xpose.msra.mxu0 0.0
    %932 = vmatprep.subr.mxu0 0.0
    %933 = vmatpush1.xpose.msra.mxu0 0.0
    %934 = vmatprep.subr.mxu0 0.0
    %935 = vmatpush1.xpose.msra.mxu0 0.0
    %936 = vmatprep.subr.mxu0 0.0
    %937 = vmatpush1.xpose.msra.mxu0 0.0
    %938 = vmatprep.subr.mxu0 0.0
    %939 = vmatpush1.xpose.msra.mxu0 0.0
    %940 = vmatprep.subr.mxu0 0.0
    %941 = vmatpush1.xpose.msra.mxu0 0.0
    %942 = vmatprep.subr.mxu0 0.0
    %943 = vmatpush1.xpose.msra.mxu0 0.0
    %944 = vmatprep.subr.mxu0 0.0
    %945 = vmatpush1.xpose.msra.mxu0 0.0
    %946 = vmatprep.subr.mxu0 0.0
    %947 = vmatpush1.xpose.msra.mxu0 0.0
    %948 = vmatprep.subr.mxu0 0.0
    %949 = vmatpush1.xpose.msra.mxu0 0.0
    %950 = vmatprep.subr.mxu0 0.0
    %951 = vmatpush1.xpose.msra.mxu0 0.0
    %952 = vmatprep.subr.mxu0 0.0
    %953 = vmatpush1.xpose.msra.mxu0 0.0
    %954 = vmatprep.mubr.f32.mxu0 0.0
    %955 = vmatmul.mubr.f32.gmra.mrb[0].mxu0 %v886
    %v956 = vpop.f32.mrb[0].mxu0
    %v957 = vadd.f32 0.0, %v956
    %v958 = vpop.f32.mrb[0].mxu0
    %959 = vdwg.mxu0
    %v960 = vsel %vm166, %v957, -inf
    %961 = vmax.xlane.f32.xlu0 %v960
    %v962 = vpop.xlane.xlu0 %961
    %v963 = vsub.f32 %v957, %v962
    %v964 = vmul.f32 %v963, 1.442695
    %v965 = vpow.pop %v964
    %v966 = vsel %vm166, %v965, 0.0
    %967 = vadd.xlane.f32.xlu0 %v966
    %v968 = vpop.xlane.xlu0 %967
    %v969 = vrcp.pop %v968
    %v970 = vmul.f32 %v965, %v969
    %971 = vrot.lane.b32.xlu0 %v153, 40
    %v972 = vpop.permute.xlu0 %971
    %v975 = vsel %vm166, %v970, 0
    %977 = vmatprep.subr.mxu0 0.0
    %978 = vmatpush1.msra.mxu0 %v972
    %979 = vmatprep.subr.mxu0 0.0
    %980 = vmatpush1.msra.mxu0 0.0
    %981 = vmatprep.subr.mxu0 0.0
    %982 = vmatpush1.msra.mxu0 0.0
    %983 = vmatprep.subr.mxu0 0.0
    %984 = vmatpush1.msra.mxu0 0.0
    %985 = vmatprep.subr.mxu0 0.0
    %986 = vmatpush1.msra.mxu0 0.0
    %987 = vmatprep.subr.mxu0 0.0
    %988 = vmatpush1.msra.mxu0 0.0
    %989 = vmatprep.subr.mxu0 0.0
    %990 = vmatpush1.msra.mxu0 0.0
    %991 = vmatprep.subr.mxu0 0.0
    %992 = vmatpush1.msra.mxu0 0.0
    %993 = vmatprep.subr.mxu0 0.0
    %994 = vmatpush1.msra.mxu0 0.0
    %995 = vmatprep.subr.mxu0 0.0
    %996 = vmatpush1.msra.mxu0 0.0
    %997 = vmatprep.subr.mxu0 0.0
    %998 = vmatpush1.msra.mxu0 0.0
    %999 = vmatprep.subr.mxu0 0.0
    %1000 = vmatpush1.msra.mxu0 0.0
    %1001 = vmatprep.subr.mxu0 0.0
    %1002 = vmatpush1.msra.mxu0 0.0
    %1003 = vmatprep.subr.mxu0 0.0
    %1004 = vmatpush1.msra.mxu0 0.0
    %1005 = vmatprep.subr.mxu0 0.0
    %1006 = vmatpush1.msra.mxu0 0.0
    %1007 = vmatprep.subr.mxu0 0.0
    %1008 = vmatpush1.msra.mxu0 0.0
    %1009 = vmatprep.subr.mxu0 0.0
    %1010 = vmatpush1.msra.mxu0 0.0
    %1011 = vmatprep.subr.mxu0 0.0
    %1012 = vmatpush1.msra.mxu0 0.0
    %1013 = vmatprep.subr.mxu0 0.0
    %1014 = vmatpush1.msra.mxu0 0.0
    %1015 = vmatprep.subr.mxu0 0.0
    %1016 = vmatpush1.msra.mxu0 0.0
    %1017 = vmatprep.subr.mxu0 0.0
    %1018 = vmatpush1.msra.mxu0 0.0
    %1019 = vmatprep.subr.mxu0 0.0
    %1020 = vmatpush1.msra.mxu0 0.0
    %1021 = vmatprep.subr.mxu0 0.0
    %1022 = vmatpush1.msra.mxu0 0.0
    %1023 = vmatprep.subr.mxu0 0.0
    %1024 = vmatpush1.msra.mxu0 0.0
    %1025 = vmatprep.subr.mxu0 0.0
    %1026 = vmatpush1.msra.mxu0 0.0
    %1027 = vmatprep.subr.mxu0 0.0
    %1028 = vmatpush1.msra.mxu0 0.0
    %1029 = vmatprep.subr.mxu0 0.0
    %1030 = vmatpush1.msra.mxu0 0.0
    %1031 = vmatprep.subr.mxu0 0.0
    %1032 = vmatpush1.msra.mxu0 0.0
    %1033 = vmatprep.subr.mxu0 0.0
    %1034 = vmatpush1.msra.mxu0 0.0
    %1035 = vmatprep.subr.mxu0 0.0
    %1036 = vmatpush1.msra.mxu0 0.0
    %1037 = vmatprep.subr.mxu0 0.0
    %1038 = vmatpush1.msra.mxu0 0.0
    %1039 = vmatprep.subr.mxu0 0.0
    %1040 = vmatpush1.msra.mxu0 0.0
    %1041 = vmatprep.mubr.f32.mxu0 0.0
    %1042 = vmatmul.mubr.f32.gmra.mrb[0].mxu0 %v975
    %v1043 = vpop.f32.mrb[0].mxu0
    %v1044 = vadd.f32 0.0, %v1043
    %v1045 = vpop.f32.mrb[0].mxu0
    %1046 = vdwg.mxu0
    %v1048 = vsel %vm166, %v1044, 0
    %1050 = vmatprep.subr.mxu0 0.0
    %1051 = vmatpush1.msra.mxu0 %v67
    %1052 = vmatprep.subr.mxu0 0.0
    %1053 = vmatpush1.msra.mxu0 0.0
    %1054 = vmatprep.subr.mxu0 0.0
    %1055 = vmatpush1.msra.mxu0 0.0
    %1056 = vmatprep.subr.mxu0 0.0
    %1057 = vmatpush1.msra.mxu0 0.0
    %1058 = vmatprep.subr.mxu0 0.0
    %1059 = vmatpush1.msra.mxu0 0.0
    %1060 = vmatprep.subr.mxu0 0.0
    %1061 = vmatpush1.msra.mxu0 0.0
    %1062 = vmatprep.subr.mxu0 0.0
    %1063 = vmatpush1.msra.mxu0 0.0
    %1064 = vmatprep.subr.mxu0 0.0
    %1065 = vmatpush1.msra.mxu0 0.0
    %1066 = vmatprep.subr.mxu0 0.0
    %1067 = vmatpush1.msra.mxu0 0.0
    %1068 = vmatprep.subr.mxu0 0.0
    %1069 = vmatpush1.msra.mxu0 0.0
    %1070 = vmatprep.subr.mxu0 0.0
    %1071 = vmatpush1.msra.mxu0 0.0
    %1072 = vmatprep.subr.mxu0 0.0
    %1073 = vmatpush1.msra.mxu0 0.0
    %1074 = vmatprep.subr.mxu0 0.0
    %1075 = vmatpush1.msra.mxu0 0.0
    %1076 = vmatprep.subr.mxu0 0.0
    %1077 = vmatpush1.msra.mxu0 0.0
    %1078 = vmatprep.subr.mxu0 0.0
    %1079 = vmatpush1.msra.mxu0 0.0
    %1080 = vmatprep.subr.mxu0 0.0
    %1081 = vmatpush1.msra.mxu0 0.0
    %1082 = vmatprep.subr.mxu0 0.0
    %1083 = vmatpush1.msra.mxu0 0.0
    %1084 = vmatprep.subr.mxu0 0.0
    %1085 = vmatpush1.msra.mxu0 0.0
    %1086 = vmatprep.subr.mxu0 0.0
    %1087 = vmatpush1.msra.mxu0 0.0
    %1088 = vmatprep.subr.mxu0 0.0
    %1089 = vmatpush1.msra.mxu0 0.0
    %1090 = vmatprep.subr.mxu0 0.0
    %1091 = vmatpush1.msra.mxu0 0.0
    %1092 = vmatprep.subr.mxu0 0.0
    %1093 = vmatpush1.msra.mxu0 0.0
    %1094 = vmatprep.subr.mxu0 0.0
    %1095 = vmatpush1.msra.mxu0 0.0
    %1096 = vmatprep.subr.mxu0 0.0
    %1097 = vmatpush1.msra.mxu0 0.0
    %1098 = vmatprep.subr.mxu0 0.0
    %1099 = vmatpush1.msra.mxu0 0.0
    %1100 = vmatprep.subr.mxu0 0.0
    %1101 = vmatpush1.msra.mxu0 0.0
    %1102 = vmatprep.subr.mxu0 0.0
    %1103 = vmatpush1.msra.mxu0 0.0
    %1104 = vmatprep.subr.mxu0 0.0
    %1105 = vmatpush1.msra.mxu0 0.0
    %1106 = vmatprep.subr.mxu0 0.0
    %1107 = vmatpush1.msra.mxu0 0.0
    %1108 = vmatprep.subr.mxu0 0.0
    %1109 = vmatpush1.msra.mxu0 0.0
    %1110 = vmatprep.subr.mxu0 0.0
    %1111 = vmatpush1.msra.mxu0 0.0
    %1112 = vmatprep.subr.mxu0 0.0
    %1113 = vmatpush1.msra.mxu0 0.0
    %1114 = vmatprep.mubr.f32.mxu0 0.0
    %1115 = vmatmul.mubr.f32.gmra.mrb[0].mxu0 %v1048
    %v1116 = vpop.f32.mrb[0].mxu0
    %v1117 = vadd.f32 0.0, %v1116
    %v1118 = vpop.f32.mrb[0].mxu0
    %1119 = vdwg.mxu0
    %v1120 = vadd.f32 %v880, %v1117
    %v1121 = vadd.f32 %v881, %v970
    %v1122 = vmul.f32 %v1121, 0.25
    %1123 = vst.msk [vmem:[#allocation6] sm:$0xff] %vm166, %v1122
    %1125 = vrot.lane.b32.xlu0 %v158, 96
    %v1126 = vpop.permute.xlu0 %1125
    %v1128 = vsel %vm166, %v162, 0
    %v1130 = vsel %vm166, %v1126, 0
    %1132 = vmatprep.subr.mxu0 0.0
    %1133 = vmatpush1.xpose.msra.mxu0 %v1130
    %1134 = vmatprep.subr.mxu0 0.0
    %1135 = vmatpush1.xpose.msra.mxu0 0.0
    %1136 = vmatprep.subr.mxu0 0.0
    %1137 = vmatpush1.xpose.msra.mxu0 0.0
    %1138 = vmatprep.subr.mxu0 0.0
    %1139 = vmatpush1.xpose.msra.mxu0 0.0
    %1140 = vmatprep.subr.mxu0 0.0
    %1141 = vmatpush1.xpose.msra.mxu0 0.0
    %1142 = vmatprep.subr.mxu0 0.0
    %1143 = vmatpush1.xpose.msra.mxu0 0.0
    %1144 = vmatprep.subr.mxu0 0.0
    %1145 = vmatpush1.xpose.msra.mxu0 0.0
    %1146 = vmatprep.subr.mxu0 0.0
    %1147 = vmatpush1.xpose.msra.mxu0 0.0
    %1148 = vmatprep.subr.mxu0 0.0
    %1149 = vmatpush1.xpose.msra.mxu0 0.0
    %1150 = vmatprep.subr.mxu0 0.0
    %1151 = vmatpush1.xpose.msra.mxu0 0.0
    %1152 = vmatprep.subr.mxu0 0.0
    %1153 = vmatpush1.xpose.msra.mxu0 0.0
    %1154 = vmatprep.subr.mxu0 0.0
    %1155 = vmatpush1.xpose.msra.mxu0 0.0
    %1156 = vmatprep.subr.mxu0 0.0
    %1157 = vmatpush1.xpose.msra.mxu0 0.0
    %1158 = vmatprep.subr.mxu0 0.0
    %1159 = vmatpush1.xpose.msra.mxu0 0.0
    %1160 = vmatprep.subr.mxu0 0.0
    %1161 = vmatpush1.xpose.msra.mxu0 0.0
    %1162 = vmatprep.subr.mxu0 0.0
    %1163 = vmatpush1.xpose.msra.mxu0 0.0
    %1164 = vmatprep.subr.mxu0 0.0
    %1165 = vmatpush1.xpose.msra.mxu0 0.0
    %1166 = vmatprep.subr.mxu0 0.0
    %1167 = vmatpush1.xpose.msra.mxu0 0.0
    %1168 = vmatprep.subr.mxu0 0.0
    %1169 = vmatpush1.xpose.msra.mxu0 0.0
    %1170 = vmatprep.subr.mxu0 0.0
    %1171 = vmatpush1.xpose.msra.mxu0 0.0
    %1172 = vmatprep.subr.mxu0 0.0
    %1173 = vmatpush1.xpose.msra.mxu0 0.0
    %1174 = vmatprep.subr.mxu0 0.0
    %1175 = vmatpush1.xpose.msra.mxu0 0.0
    %1176 = vmatprep.subr.mxu0 0.0
    %1177 = vmatpush1.xpose.msra.mxu0 0.0
    %1178 = vmatprep.subr.mxu0 0.0
    %1179 = vmatpush1.xpose.msra.mxu0 0.0
    %1180 = vmatprep.subr.mxu0 0.0
    %1181 = vmatpush1.xpose.msra.mxu0 0.0
    %1182 = vmatprep.subr.mxu0 0.0
    %1183 = vmatpush1.xpose.msra.mxu0 0.0
    %1184 = vmatprep.subr.mxu0 0.0
    %1185 = vmatpush1.xpose.msra.mxu0 0.0
    %1186 = vmatprep.subr.mxu0 0.0
    %1187 = vmatpush1.xpose.msra.mxu0 0.0
    %1188 = vmatprep.subr.mxu0 0.0
    %1189 = vmatpush1.xpose.msra.mxu0 0.0
    %1190 = vmatprep.subr.mxu0 0.0
    %1191 = vmatpush1.xpose.msra.mxu0 0.0
    %1192 = vmatprep.subr.mxu0 0.0
    %1193 = vmatpush1.xpose.msra.mxu0 0.0
    %1194 = vmatprep.subr.mxu0 0.0
    %1195 = vmatpush1.xpose.msra.mxu0 0.0
    %1196 = vmatprep.mubr.f32.mxu0 0.0
    %1197 = vmatmul.mubr.f32.gmra.mrb[0].mxu0 %v1128
    %v1198 = vpop.f32.mrb[0].mxu0
    %v1199 = vadd.f32 0.0, %v1198
    %v1200 = vpop.f32.mrb[0].mxu0
    %1201 = vdwg.mxu0
    %v1202 = vsel %vm166, %v1199, -inf
    %1203 = vmax.xlane.f32.xlu0 %v1202
    %v1204 = vpop.xlane.xlu0 %1203
    %v1205 = vsub.f32 %v1199, %v1204
    %v1206 = vmul.f32 %v1205, 1.442695
    %v1207 = vpow.pop %v1206
    %v1208 = vsel %vm166, %v1207, 0.0
    %1209 = vadd.xlane.f32.xlu0 %v1208
    %v1210 = vpop.xlane.xlu0 %1209
    %v1211 = vrcp.pop %v1210
    %v1212 = vmul.f32 %v1207, %v1211
    %1213 = vrot.lane.b32.xlu0 %v158, 64
    %v1214 = vpop.permute.xlu0 %1213
    %v1217 = vsel %vm166, %v1212, 0
    %1219 = vmatprep.subr.mxu0 0.0
    %1220 = vmatpush1.msra.mxu0 %v1214
    %1221 = vmatprep.subr.mxu0 0.0
    %1222 = vmatpush1.msra.mxu0 0.0
    %1223 = vmatprep.subr.mxu0 0.0
    %1224 = vmatpush1.msra.mxu0 0.0
    %1225 = vmatprep.subr.mxu0 0.0
    %1226 = vmatpush1.msra.mxu0 0.0
    %1227 = vmatprep.subr.mxu0 0.0
    %1228 = vmatpush1.msra.mxu0 0.0
    %1229 = vmatprep.subr.mxu0 0.0
    %1230 = vmatpush1.msra.mxu0 0.0
    %1231 = vmatprep.subr.mxu0 0.0
    %1232 = vmatpush1.msra.mxu0 0.0
    %1233 = vmatprep.subr.mxu0 0.0
    %1234 = vmatpush1.msra.mxu0 0.0
    %1235 = vmatprep.subr.mxu0 0.0
    %1236 = vmatpush1.msra.mxu0 0.0
    %1237 = vmatprep.subr.mxu0 0.0
    %1238 = vmatpush1.msra.mxu0 0.0
    %1239 = vmatprep.subr.mxu0 0.0
    %1240 = vmatpush1.msra.mxu0 0.0
    %1241 = vmatprep.subr.mxu0 0.0
    %1242 = vmatpush1.msra.mxu0 0.0
    %1243 = vmatprep.subr.mxu0 0.0
    %1244 = vmatpush1.msra.mxu0 0.0
    %1245 = vmatprep.subr.mxu0 0.0
    %1246 = vmatpush1.msra.mxu0 0.0
    %1247 = vmatprep.subr.mxu0 0.0
    %1248 = vmatpush1.msra.mxu0 0.0
    %1249 = vmatprep.subr.mxu0 0.0
    %1250 = vmatpush1.msra.mxu0 0.0
    %1251 = vmatprep.subr.mxu0 0.0
    %1252 = vmatpush1.msra.mxu0 0.0
    %1253 = vmatprep.subr.mxu0 0.0
    %1254 = vmatpush1.msra.mxu0 0.0
    %1255 = vmatprep.subr.mxu0 0.0
    %1256 = vmatpush1.msra.mxu0 0.0
    %1257 = vmatprep.subr.mxu0 0.0
    %1258 = vmatpush1.msra.mxu0 0.0
    %1259 = vmatprep.subr.mxu0 0.0
    %1260 = vmatpush1.msra.mxu0 0.0
    %1261 = vmatprep.subr.mxu0 0.0
    %1262 = vmatpush1.msra.mxu0 0.0
    %1263 = vmatprep.subr.mxu0 0.0
    %1264 = vmatpush1.msra.mxu0 0.0
    %1265 = vmatprep.subr.mxu0 0.0
    %1266 = vmatpush1.msra.mxu0 0.0
    %1267 = vmatprep.subr.mxu0 0.0
    %1268 = vmatpush1.msra.mxu0 0.0
    %1269 = vmatprep.subr.mxu0 0.0
    %1270 = vmatpush1.msra.mxu0 0.0
    %1271 = vmatprep.subr.mxu0 0.0
    %1272 = vmatpush1.msra.mxu0 0.0
    %1273 = vmatprep.subr.mxu0 0.0
    %1274 = vmatpush1.msra.mxu0 0.0
    %1275 = vmatprep.subr.mxu0 0.0
    %1276 = vmatpush1.msra.mxu0 0.0
    %1277 = vmatprep.subr.mxu0 0.0
    %1278 = vmatpush1.msra.mxu0 0.0
    %1279 = vmatprep.subr.mxu0 0.0
    %1280 = vmatpush1.msra.mxu0 0.0
    %1281 = vmatprep.subr.mxu0 0.0
    %1282 = vmatpush1.msra.mxu0 0.0
    %1283 = vmatprep.mubr.f32.mxu0 0.0
    %1284 = vmatmul.mubr.f32.gmra.mrb[0].mxu0 %v1217
    %v1285 = vpop.f32.mrb[0].mxu0
    %v1286 = vadd.f32 0.0, %v1285
    %v1287 = vpop.f32.mrb[0].mxu0
    %1288 = vdwg.mxu0
    %v1289 = vadd.f32 %v1212, 0.0
    %1290 = vrot.lane.b32.xlu0 %v162, 120
    %v1291 = vpop.permute.xlu0 %1290
    %1292 = vrot.lane.b32.xlu0 %v158, 88
    %v1293 = vpop.permute.xlu0 %1292
    %v1294 = vsel %vm166, %v1291, 0
    %v1296 = vsel %vm166, %v1293, 0
    %1298 = vmatprep.subr.mxu0 0.0
    %1299 = vmatpush1.xpose.msra.mxu0 %v1296
    %1300 = vmatprep.subr.mxu0 0.0
    %1301 = vmatpush1.xpose.msra.mxu0 0.0
    %1302 = vmatprep.subr.mxu0 0.0
    %1303 = vmatpush1.xpose.msra.mxu0 0.0
    %1304 = vmatprep.subr.mxu0 0.0
    %1305 = vmatpush1.xpose.msra.mxu0 0.0
    %1306 = vmatprep.subr.mxu0 0.0
    %1307 = vmatpush1.xpose.msra.mxu0 0.0
    %1308 = vmatprep.subr.mxu0 0.0
    %1309 = vmatpush1.xpose.msra.mxu0 0.0
    %1310 = vmatprep.subr.mxu0 0.0
    %1311 = vmatpush1.xpose.msra.mxu0 0.0
    %1312 = vmatprep.subr.mxu0 0.0
    %1313 = vmatpush1.xpose.msra.mxu0 0.0
    %1314 = vmatprep.subr.mxu0 0.0
    %1315 = vmatpush1.xpose.msra.mxu0 0.0
    %1316 = vmatprep.subr.mxu0 0.0
    %1317 = vmatpush1.xpose.msra.mxu0 0.0
    %1318 = vmatprep.subr.mxu0 0.0
    %1319 = vmatpush1.xpose.msra.mxu0 0.0
    %1320 = vmatprep.subr.mxu0 0.0
    %1321 = vmatpush1.xpose.msra.mxu0 0.0
    %1322 = vmatprep.subr.mxu0 0.0
    %1323 = vmatpush1.xpose.msra.mxu0 0.0
    %1324 = vmatprep.subr.mxu0 0.0
    %1325 = vmatpush1.xpose.msra.mxu0 0.0
    %1326 = vmatprep.subr.mxu0 0.0
    %1327 = vmatpush1.xpose.msra.mxu0 0.0
    %1328 = vmatprep.subr.mxu0 0.0
    %1329 = vmatpush1.xpose.msra.mxu0 0.0
    %1330 = vmatprep.subr.mxu0 0.0
    %1331 = vmatpush1.xpose.msra.mxu0 0.0
    %1332 = vmatprep.subr.mxu0 0.0
    %1333 = vmatpush1.xpose.msra.mxu0 0.0
    %1334 = vmatprep.subr.mxu0 0.0
    %1335 = vmatpush1.xpose.msra.mxu0 0.0
    %1336 = vmatprep.subr.mxu0 0.0
    %1337 = vmatpush1.xpose.msra.mxu0 0.0
    %1338 = vmatprep.subr.mxu0 0.0
    %1339 = vmatpush1.xpose.msra.mxu0 0.0
    %1340 = vmatprep.subr.mxu0 0.0
    %1341 = vmatpush1.xpose.msra.mxu0 0.0
    %1342 = vmatprep.subr.mxu0 0.0
    %1343 = vmatpush1.xpose.msra.mxu0 0.0
    %1344 = vmatprep.subr.mxu0 0.0
    %1345 = vmatpush1.xpose.msra.mxu0 0.0
    %1346 = vmatprep.subr.mxu0 0.0
    %1347 = vmatpush1.xpose.msra.mxu0 0.0
    %1348 = vmatprep.subr.mxu0 0.0
    %1349 = vmatpush1.xpose.msra.mxu0 0.0
    %1350 = vmatprep.subr.mxu0 0.0
    %1351 = vmatpush1.xpose.msra.mxu0 0.0
    %1352 = vmatprep.subr.mxu0 0.0
    %1353 = vmatpush1.xpose.msra.mxu0 0.0
    %1354 = vmatprep.subr.mxu0 0.0
    %1355 = vmatpush1.xpose.msra.mxu0 0.0
    %1356 = vmatprep.subr.mxu0 0.0
    %1357 = vmatpush1.xpose.msra.mxu0 0.0
    %1358 = vmatprep.subr.mxu0 0.0
    %1359 = vmatpush1.xpose.msra.mxu0 0.0
    %1360 = vmatprep.subr.mxu0 0.0
    %1361 = vmatpush1.xpose.msra.mxu0 0.0
    %1362 = vmatprep.mubr.f32.mxu0 0.0
    %1363 = vmatmul.mubr.f32.gmra.mrb[0].mxu0 %v1294
    %v1364 = vpop.f32.mrb[0].mxu0
    %v1365 = vadd.f32 0.0, %v1364
    %v1366 = vpop.f32.mrb[0].mxu0
    %1367 = vdwg.mxu0
    %v1368 = vsel %vm166, %v1365, -inf
    %1369 = vmax.xlane.f32.xlu0 %v1368
    %v1370 = vpop.xlane.xlu0 %1369
    %v1371 = vsub.f32 %v1365, %v1370
    %v1372 = vmul.f32 %v1371, 1.442695
    %v1373 = vpow.pop %v1372
    %v1374 = vsel %vm166, %v1373, 0.0
    %1375 = vadd.xlane.f32.xlu0 %v1374
    %v1376 = vpop.xlane.xlu0 %1375
    %v1377 = vrcp.pop %v1376
    %v1378 = vmul.f32 %v1373, %v1377
    %1379 = vrot.lane.b32.xlu0 %v158, 56
    %v1380 = vpop.permute.xlu0 %1379
    %v1383 = vsel %vm166, %v1378, 0
    %1385 = vmatprep.subr.mxu0 0.0
    %1386 = vmatpush1.msra.mxu0 %v1380
    %1387 = vmatprep.subr.mxu0 0.0
    %1388 = vmatpush1.msra.mxu0 0.0
    %1389 = vmatprep.subr.mxu0 0.0
    %1390 = vmatpush1.msra.mxu0 0.0
    %1391 = vmatprep.subr.mxu0 0.0
    %1392 = vmatpush1.msra.mxu0 0.0
    %1393 = vmatprep.subr.mxu0 0.0
    %1394 = vmatpush1.msra.mxu0 0.0
    %1395 = vmatprep.subr.mxu0 0.0
    %1396 = vmatpush1.msra.mxu0 0.0
    %1397 = vmatprep.subr.mxu0 0.0
    %1398 = vmatpush1.msra.mxu0 0.0
    %1399 = vmatprep.subr.mxu0 0.0
    %1400 = vmatpush1.msra.mxu0 0.0
    %1401 = vmatprep.subr.mxu0 0.0
    %1402 = vmatpush1.msra.mxu0 0.0
    %1403 = vmatprep.subr.mxu0 0.0
    %1404 = vmatpush1.msra.mxu0 0.0
    %1405 = vmatprep.subr.mxu0 0.0
    %1406 = vmatpush1.msra.mxu0 0.0
    %1407 = vmatprep.subr.mxu0 0.0
    %1408 = vmatpush1.msra.mxu0 0.0
    %1409 = vmatprep.subr.mxu0 0.0
    %1410 = vmatpush1.msra.mxu0 0.0
    %1411 = vmatprep.subr.mxu0 0.0
    %1412 = vmatpush1.msra.mxu0 0.0
    %1413 = vmatprep.subr.mxu0 0.0
    %1414 = vmatpush1.msra.mxu0 0.0
    %1415 = vmatprep.subr.mxu0 0.0
    %1416 = vmatpush1.msra.mxu0 0.0
    %1417 = vmatprep.subr.mxu0 0.0
    %1418 = vmatpush1.msra.mxu0 0.0
    %1419 = vmatprep.subr.mxu0 0.0
    %1420 = vmatpush1.msra.mxu0 0.0
    %1421 = vmatprep.subr.mxu0 0.0
    %1422 = vmatpush1.msra.mxu0 0.0
    %1423 = vmatprep.subr.mxu0 0.0
    %1424 = vmatpush1.msra.mxu0 0.0
    %1425 = vmatprep.subr.mxu0 0.0
    %1426 = vmatpush1.msra.mxu0 0.0
    %1427 = vmatprep.subr.mxu0 0.0
    %1428 = vmatpush1.msra.mxu0 0.0
    %1429 = vmatprep.subr.mxu0 0.0
    %1430 = vmatpush1.msra.mxu0 0.0
    %1431 = vmatprep.subr.mxu0 0.0
    %1432 = vmatpush1.msra.mxu0 0.0
    %1433 = vmatprep.subr.mxu0 0.0
    %1434 = vmatpush1.msra.mxu0 0.0
    %1435 = vmatprep.subr.mxu0 0.0
    %1436 = vmatpush1.msra.mxu0 0.0
    %1437 = vmatprep.subr.mxu0 0.0
    %1438 = vmatpush1.msra.mxu0 0.0
    %1439 = vmatprep.subr.mxu0 0.0
    %1440 = vmatpush1.msra.mxu0 0.0
    %1441 = vmatprep.subr.mxu0 0.0
    %1442 = vmatpush1.msra.mxu0 0.0
    %1443 = vmatprep.subr.mxu0 0.0
    %1444 = vmatpush1.msra.mxu0 0.0
    %1445 = vmatprep.subr.mxu0 0.0
    %1446 = vmatpush1.msra.mxu0 0.0
    %1447 = vmatprep.subr.mxu0 0.0
    %1448 = vmatpush1.msra.mxu0 0.0
    %1449 = vmatprep.mubr.f32.mxu0 0.0
    %1450 = vmatmul.mubr.f32.gmra.mrb[0].mxu0 %v1383
    %v1451 = vpop.f32.mrb[0].mxu0
    %v1452 = vadd.f32 0.0, %v1451
    %v1453 = vpop.f32.mrb[0].mxu0
    %1454 = vdwg.mxu0
    %v1456 = vsel %vm166, %v1452, 0
    %1458 = vmatprep.subr.mxu0 0.0
    %1459 = vmatpush1.msra.mxu0 %v65
    %1460 = vmatprep.subr.mxu0 0.0
    %1461 = vmatpush1.msra.mxu0 0.0
    %1462 = vmatprep.subr.mxu0 0.0
    %1463 = vmatpush1.msra.mxu0 0.0
    %1464 = vmatprep.subr.mxu0 0.0
    %1465 = vmatpush1.msra.mxu0 0.0
    %1466 = vmatprep.subr.mxu0 0.0
    %1467 = vmatpush1.msra.mxu0 0.0
    %1468 = vmatprep.subr.mxu0 0.0
    %1469 = vmatpush1.msra.mxu0 0.0
    %1470 = vmatprep.subr.mxu0 0.0
    %1471 = vmatpush1.msra.mxu0 0.0
    %1472 = vmatprep.subr.mxu0 0.0
    %1473 = vmatpush1.msra.mxu0 0.0
    %1474 = vmatprep.subr.mxu0 0.0
    %1475 = vmatpush1.msra.mxu0 0.0
    %1476 = vmatprep.subr.mxu0 0.0
    %1477 = vmatpush1.msra.mxu0 0.0
    %1478 = vmatprep.subr.mxu0 0.0
    %1479 = vmatpush1.msra.mxu0 0.0
    %1480 = vmatprep.subr.mxu0 0.0
    %1481 = vmatpush1.msra.mxu0 0.0
    %1482 = vmatprep.subr.mxu0 0.0
    %1483 = vmatpush1.msra.mxu0 0.0
    %1484 = vmatprep.subr.mxu0 0.0
    %1485 = vmatpush1.msra.mxu0 0.0
    %1486 = vmatprep.subr.mxu0 0.0
    %1487 = vmatpush1.msra.mxu0 0.0
    %1488 = vmatprep.subr.mxu0 0.0
    %1489 = vmatpush1.msra.mxu0 0.0
    %1490 = vmatprep.subr.mxu0 0.0
    %1491 = vmatpush1.msra.mxu0 0.0
    %1492 = vmatprep.subr.mxu0 0.0
    %1493 = vmatpush1.msra.mxu0 0.0
    %1494 = vmatprep.subr.mxu0 0.0
    %1495 = vmatpush1.msra.mxu0 0.0
    %1496 = vmatprep.subr.mxu0 0.0
    %1497 = vmatpush1.msra.mxu0 0.0
    %1498 = vmatprep.subr.mxu0 0.0
    %1499 = vmatpush1.msra.mxu0 0.0
    %1500 = vmatprep.subr.mxu0 0.0
    %1501 = vmatpush1.msra.mxu0 0.0
    %1502 = vmatprep.subr.mxu0 0.0
    %1503 = vmatpush1.msra.mxu0 0.0
    %1504 = vmatprep.subr.mxu0 0.0
    %1505 = vmatpush1.msra.mxu0 0.0
    %1506 = vmatprep.subr.mxu0 0.0
    %1507 = vmatpush1.msra.mxu0 0.0
    %1508 = vmatprep.subr.mxu0 0.0
    %1509 = vmatpush1.msra.mxu0 0.0
    %1510 = vmatprep.subr.mxu0 0.0
    %1511 = vmatpush1.msra.mxu0 0.0
    %1512 = vmatprep.subr.mxu0 0.0
    %1513 = vmatpush1.msra.mxu0 0.0
    %1514 = vmatprep.subr.mxu0 0.0
    %1515 = vmatpush1.msra.mxu0 0.0
    %1516 = vmatprep.subr.mxu0 0.0
    %1517 = vmatpush1.msra.mxu0 0.0
    %1518 = vmatprep.subr.mxu0 0.0
    %1519 = vmatpush1.msra.mxu0 0.0
    %1520 = vmatprep.subr.mxu0 0.0
    %1521 = vmatpush1.msra.mxu0 0.0
    %1522 = vmatprep.mubr.f32.mxu0 0.0
    %1523 = vmatmul.mubr.f32.gmra.mrb[0].mxu0 %v1456
    %v1524 = vpop.f32.mrb[0].mxu0
    %v1525 = vadd.f32 0.0, %v1524
    %v1526 = vpop.f32.mrb[0].mxu0
    %1527 = vdwg.mxu0
    %v1529 = vsel %vm166, %v1286, 0
    %1531 = vmatprep.subr.mxu0 0.0
    %1532 = vmatpush1.msra.mxu0 %v64
    %1533 = vmatprep.subr.mxu0 0.0
    %1534 = vmatpush1.msra.mxu0 0.0
    %1535 = vmatprep.subr.mxu0 0.0
    %1536 = vmatpush1.msra.mxu0 0.0
    %1537 = vmatprep.subr.mxu0 0.0
    %1538 = vmatpush1.msra.mxu0 0.0
    %1539 = vmatprep.subr.mxu0 0.0
    %1540 = vmatpush1.msra.mxu0 0.0
    %1541 = vmatprep.subr.mxu0 0.0
    %1542 = vmatpush1.msra.mxu0 0.0
    %1543 = vmatprep.subr.mxu0 0.0
    %1544 = vmatpush1.msra.mxu0 0.0
    %1545 = vmatprep.subr.mxu0 0.0
    %1546 = vmatpush1.msra.mxu0 0.0
    %1547 = vmatprep.subr.mxu0 0.0
    %1548 = vmatpush1.msra.mxu0 0.0
    %1549 = vmatprep.subr.mxu0 0.0
    %1550 = vmatpush1.msra.mxu0 0.0
    %1551 = vmatprep.subr.mxu0 0.0
    %1552 = vmatpush1.msra.mxu0 0.0
    %1553 = vmatprep.subr.mxu0 0.0
    %1554 = vmatpush1.msra.mxu0 0.0
    %1555 = vmatprep.subr.mxu0 0.0
    %1556 = vmatpush1.msra.mxu0 0.0
    %1557 = vmatprep.subr.mxu0 0.0
    %1558 = vmatpush1.msra.mxu0 0.0
    %1559 = vmatprep.subr.mxu0 0.0
    %1560 = vmatpush1.msra.mxu0 0.0
    %1561 = vmatprep.subr.mxu0 0.0
    %1562 = vmatpush1.msra.mxu0 0.0
    %1563 = vmatprep.subr.mxu0 0.0
    %1564 = vmatpush1.msra.mxu0 0.0
    %1565 = vmatprep.subr.mxu0 0.0
    %1566 = vmatpush1.msra.mxu0 0.0
    %1567 = vmatprep.subr.mxu0 0.0
    %1568 = vmatpush1.msra.mxu0 0.0
    %1569 = vmatprep.subr.mxu0 0.0
    %1570 = vmatpush1.msra.mxu0 0.0
    %1571 = vmatprep.subr.mxu0 0.0
    %1572 = vmatpush1.msra.mxu0 0.0
    %1573 = vmatprep.subr.mxu0 0.0
    %1574 = vmatpush1.msra.mxu0 0.0
    %1575 = vmatprep.subr.mxu0 0.0
    %1576 = vmatpush1.msra.mxu0 0.0
    %1577 = vmatprep.subr.mxu0 0.0
    %1578 = vmatpush1.msra.mxu0 0.0
    %1579 = vmatprep.subr.mxu0 0.0
    %1580 = vmatpush1.msra.mxu0 0.0
    %1581 = vmatprep.subr.mxu0 0.0
    %1582 = vmatpush1.msra.mxu0 0.0
    %1583 = vmatprep.subr.mxu0 0.0
    %1584 = vmatpush1.msra.mxu0 0.0
    %1585 = vmatprep.subr.mxu0 0.0
    %1586 = vmatpush1.msra.mxu0 0.0
    %1587 = vmatprep.subr.mxu0 0.0
    %1588 = vmatpush1.msra.mxu0 0.0
    %1589 = vmatprep.subr.mxu0 0.0
    %1590 = vmatpush1.msra.mxu0 0.0
    %1591 = vmatprep.subr.mxu0 0.0
    %1592 = vmatpush1.msra.mxu0 0.0
    %1593 = vmatprep.subr.mxu0 0.0
    %1594 = vmatpush1.msra.mxu0 0.0
    %1595 = vmatprep.mubr.f32.mxu0 0.0
    %1596 = vmatmul.mubr.f32.gmra.mrb[0].mxu0 %v1529
    %v1597 = vpop.f32.mrb[0].mxu0
    %v1598 = vadd.f32 %v1525, %v1597
    %v1599 = vpop.f32.mrb[0].mxu0
    %1600 = vdwg.mxu0
    %v1601 = vadd.f32 %v1289, %v1378
    %1602 = vrot.lane.b32.xlu0 %v162, 112
    %v1603 = vpop.permute.xlu0 %1602
    %1604 = vrot.lane.b32.xlu0 %v158, 80
    %v1605 = vpop.permute.xlu0 %1604
    %v1606 = vsel %vm166, %v1603, 0
    %v1608 = vsel %vm166, %v1605, 0
    %1610 = vmatprep.subr.mxu0 0.0
    %1611 = vmatpush1.xpose.msra.mxu0 %v1608
    %1612 = vmatprep.subr.mxu0 0.0
    %1613 = vmatpush1.xpose.msra.mxu0 0.0
    %1614 = vmatprep.subr.mxu0 0.0
    %1615 = vmatpush1.xpose.msra.mxu0 0.0
    %1616 = vmatprep.subr.mxu0 0.0
    %1617 = vmatpush1.xpose.msra.mxu0 0.0
    %1618 = vmatprep.subr.mxu0 0.0
    %1619 = vmatpush1.xpose.msra.mxu0 0.0
    %1620 = vmatprep.subr.mxu0 0.0
    %1621 = vmatpush1.xpose.msra.mxu0 0.0
    %1622 = vmatprep.subr.mxu0 0.0
    %1623 = vmatpush1.xpose.msra.mxu0 0.0
    %1624 = vmatprep.subr.mxu0 0.0
    %1625 = vmatpush1.xpose.msra.mxu0 0.0
    %1626 = vmatprep.subr.mxu0 0.0
    %1627 = vmatpush1.xpose.msra.mxu0 0.0
    %1628 = vmatprep.subr.mxu0 0.0
    %1629 = vmatpush1.xpose.msra.mxu0 0.0
    %1630 = vmatprep.subr.mxu0 0.0
    %1631 = vmatpush1.xpose.msra.mxu0 0.0
    %1632 = vmatprep.subr.mxu0 0.0
    %1633 = vmatpush1.xpose.msra.mxu0 0.0
    %1634 = vmatprep.subr.mxu0 0.0
    %1635 = vmatpush1.xpose.msra.mxu0 0.0
    %1636 = vmatprep.subr.mxu0 0.0
    %1637 = vmatpush1.xpose.msra.mxu0 0.0
    %1638 = vmatprep.subr.mxu0 0.0
    %1639 = vmatpush1.xpose.msra.mxu0 0.0
    %1640 = vmatprep.subr.mxu0 0.0
    %1641 = vmatpush1.xpose.msra.mxu0 0.0
    %1642 = vmatprep.subr.mxu0 0.0
    %1643 = vmatpush1.xpose.msra.mxu0 0.0
    %1644 = vmatprep.subr.mxu0 0.0
    %1645 = vmatpush1.xpose.msra.mxu0 0.0
    %1646 = vmatprep.subr.mxu0 0.0
    %1647 = vmatpush1.xpose.msra.mxu0 0.0
    %1648 = vmatprep.subr.mxu0 0.0
    %1649 = vmatpush1.xpose.msra.mxu0 0.0
    %1650 = vmatprep.subr.mxu0 0.0
    %1651 = vmatpush1.xpose.msra.mxu0 0.0
    %1652 = vmatprep.subr.mxu0 0.0
    %1653 = vmatpush1.xpose.msra.mxu0 0.0
    %1654 = vmatprep.subr.mxu0 0.0
    %1655 = vmatpush1.xpose.msra.mxu0 0.0
    %1656 = vmatprep.subr.mxu0 0.0
    %1657 = vmatpush1.xpose.msra.mxu0 0.0
    %1658 = vmatprep.subr.mxu0 0.0
    %1659 = vmatpush1.xpose.msra.mxu0 0.0
    %1660 = vmatprep.subr.mxu0 0.0
    %1661 = vmatpush1.xpose.msra.mxu0 0.0
    %1662 = vmatprep.subr.mxu0 0.0
    %1663 = vmatpush1.xpose.msra.mxu0 0.0
    %1664 = vmatprep.subr.mxu0 0.0
    %1665 = vmatpush1.xpose.msra.mxu0 0.0
    %1666 = vmatprep.subr.mxu0 0.0
    %1667 = vmatpush1.xpose.msra.mxu0 0.0
    %1668 = vmatprep.subr.mxu0 0.0
    %1669 = vmatpush1.xpose.msra.mxu0 0.0
    %1670 = vmatprep.subr.mxu0 0.0
    %1671 = vmatpush1.xpose.msra.mxu0 0.0
    %1672 = vmatprep.subr.mxu0 0.0
    %1673 = vmatpush1.xpose.msra.mxu0 0.0
    %1674 = vmatprep.mubr.f32.mxu0 0.0
    %1675 = vmatmul.mubr.f32.gmra.mrb[0].mxu0 %v1606
    %v1676 = vpop.f32.mrb[0].mxu0
    %v1677 = vadd.f32 0.0, %v1676
    %v1678 = vpop.f32.mrb[0].mxu0
    %1679 = vdwg.mxu0
    %v1680 = vsel %vm166, %v1677, -inf
    %1681 = vmax.xlane.f32.xlu0 %v1680
    %v1682 = vpop.xlane.xlu0 %1681
    %v1683 = vsub.f32 %v1677, %v1682
    %v1684 = vmul.f32 %v1683, 1.442695
    %v1685 = vpow.pop %v1684
    %v1686 = vsel %vm166, %v1685, 0.0
    %1687 = vadd.xlane.f32.xlu0 %v1686
    %v1688 = vpop.xlane.xlu0 %1687
    %v1689 = vrcp.pop %v1688
    %v1690 = vmul.f32 %v1685, %v1689
    %1691 = vrot.lane.b32.xlu0 %v158, 48
    %v1692 = vpop.permute.xlu0 %1691
    %v1695 = vsel %vm166, %v1690, 0
    %1697 = vmatprep.subr.mxu0 0.0
    %1698 = vmatpush1.msra.mxu0 %v1692
    %1699 = vmatprep.subr.mxu0 0.0
    %1700 = vmatpush1.msra.mxu0 0.0
    %1701 = vmatprep.subr.mxu0 0.0
    %1702 = vmatpush1.msra.mxu0 0.0
    %1703 = vmatprep.subr.mxu0 0.0
    %1704 = vmatpush1.msra.mxu0 0.0
    %1705 = vmatprep.subr.mxu0 0.0
    %1706 = vmatpush1.msra.mxu0 0.0
    %1707 = vmatprep.subr.mxu0 0.0
    %1708 = vmatpush1.msra.mxu0 0.0
    %1709 = vmatprep.subr.mxu0 0.0
    %1710 = vmatpush1.msra.mxu0 0.0
    %1711 = vmatprep.subr.mxu0 0.0
    %1712 = vmatpush1.msra.mxu0 0.0
    %1713 = vmatprep.subr.mxu0 0.0
    %1714 = vmatpush1.msra.mxu0 0.0
    %1715 = vmatprep.subr.mxu0 0.0
    %1716 = vmatpush1.msra.mxu0 0.0
    %1717 = vmatprep.subr.mxu0 0.0
    %1718 = vmatpush1.msra.mxu0 0.0
    %1719 = vmatprep.subr.mxu0 0.0
    %1720 = vmatpush1.msra.mxu0 0.0
    %1721 = vmatprep.subr.mxu0 0.0
    %1722 = vmatpush1.msra.mxu0 0.0
    %1723 = vmatprep.subr.mxu0 0.0
    %1724 = vmatpush1.msra.mxu0 0.0
    %1725 = vmatprep.subr.mxu0 0.0
    %1726 = vmatpush1.msra.mxu0 0.0
    %1727 = vmatprep.subr.mxu0 0.0
    %1728 = vmatpush1.msra.mxu0 0.0
    %1729 = vmatprep.subr.mxu0 0.0
    %1730 = vmatpush1.msra.mxu0 0.0
    %1731 = vmatprep.subr.mxu0 0.0
    %1732 = vmatpush1.msra.mxu0 0.0
    %1733 = vmatprep.subr.mxu0 0.0
    %1734 = vmatpush1.msra.mxu0 0.0
    %1735 = vmatprep.subr.mxu0 0.0
    %1736 = vmatpush1.msra.mxu0 0.0
    %1737 = vmatprep.subr.mxu0 0.0
    %1738 = vmatpush1.msra.mxu0 0.0
    %1739 = vmatprep.subr.mxu0 0.0
    %1740 = vmatpush1.msra.mxu0 0.0
    %1741 = vmatprep.subr.mxu0 0.0
    %1742 = vmatpush1.msra.mxu0 0.0
    %1743 = vmatprep.subr.mxu0 0.0
    %1744 = vmatpush1.msra.mxu0 0.0
    %1745 = vmatprep.subr.mxu0 0.0
    %1746 = vmatpush1.msra.mxu0 0.0
    %1747 = vmatprep.subr.mxu0 0.0
    %1748 = vmatpush1.msra.mxu0 0.0
    %1749 = vmatprep.subr.mxu0 0.0
    %1750 = vmatpush1.msra.mxu0 0.0
    %1751 = vmatprep.subr.mxu0 0.0
    %1752 = vmatpush1.msra.mxu0 0.0
    %1753 = vmatprep.subr.mxu0 0.0
    %1754 = vmatpush1.msra.mxu0 0.0
    %1755 = vmatprep.subr.mxu0 0.0
    %1756 = vmatpush1.msra.mxu0 0.0
    %1757 = vmatprep.subr.mxu0 0.0
    %1758 = vmatpush1.msra.mxu0 0.0
    %1759 = vmatprep.subr.mxu0 0.0
    %1760 = vmatpush1.msra.mxu0 0.0
    %1761 = vmatprep.mubr.f32.mxu0 0.0
    %1762 = vmatmul.mubr.f32.gmra.mrb[0].mxu0 %v1695
    %v1763 = vpop.f32.mrb[0].mxu0
    %v1764 = vadd.f32 0.0, %v1763
    %v1765 = vpop.f32.mrb[0].mxu0
    %1766 = vdwg.mxu0
    %v1768 = vsel %vm166, %v1764, 0
    %1770 = vmatprep.subr.mxu0 0.0
    %1771 = vmatpush1.msra.mxu0 %v66
    %1772 = vmatprep.subr.mxu0 0.0
    %1773 = vmatpush1.msra.mxu0 0.0
    %1774 = vmatprep.subr.mxu0 0.0
    %1775 = vmatpush1.msra.mxu0 0.0
    %1776 = vmatprep.subr.mxu0 0.0
    %1777 = vmatpush1.msra.mxu0 0.0
    %1778 = vmatprep.subr.mxu0 0.0
    %1779 = vmatpush1.msra.mxu0 0.0
    %1780 = vmatprep.subr.mxu0 0.0
    %1781 = vmatpush1.msra.mxu0 0.0
    %1782 = vmatprep.subr.mxu0 0.0
    %1783 = vmatpush1.msra.mxu0 0.0
    %1784 = vmatprep.subr.mxu0 0.0
    %1785 = vmatpush1.msra.mxu0 0.0
    %1786 = vmatprep.subr.mxu0 0.0
    %1787 = vmatpush1.msra.mxu0 0.0
    %1788 = vmatprep.subr.mxu0 0.0
    %1789 = vmatpush1.msra.mxu0 0.0
    %1790 = vmatprep.subr.mxu0 0.0
    %1791 = vmatpush1.msra.mxu0 0.0
    %1792 = vmatprep.subr.mxu0 0.0
    %1793 = vmatpush1.msra.mxu0 0.0
    %1794 = vmatprep.subr.mxu0 0.0
    %1795 = vmatpush1.msra.mxu0 0.0
    %1796 = vmatprep.subr.mxu0 0.0
    %1797 = vmatpush1.msra.mxu0 0.0
    %1798 = vmatprep.subr.mxu0 0.0
    %1799 = vmatpush1.msra.mxu0 0.0
    %1800 = vmatprep.subr.mxu0 0.0
    %1801 = vmatpush1.msra.mxu0 0.0
    %1802 = vmatprep.subr.mxu0 0.0
    %1803 = vmatpush1.msra.mxu0 0.0
    %1804 = vmatprep.subr.mxu0 0.0
    %1805 = vmatpush1.msra.mxu0 0.0
    %1806 = vmatprep.subr.mxu0 0.0
    %1807 = vmatpush1.msra.mxu0 0.0
    %1808 = vmatprep.subr.mxu0 0.0
    %1809 = vmatpush1.msra.mxu0 0.0
    %1810 = vmatprep.subr.mxu0 0.0
    %1811 = vmatpush1.msra.mxu0 0.0
    %1812 = vmatprep.subr.mxu0 0.0
    %1813 = vmatpush1.msra.mxu0 0.0
    %1814 = vmatprep.subr.mxu0 0.0
    %1815 = vmatpush1.msra.mxu0 0.0
    %1816 = vmatprep.subr.mxu0 0.0
    %1817 = vmatpush1.msra.mxu0 0.0
    %1818 = vmatprep.subr.mxu0 0.0
    %1819 = vmatpush1.msra.mxu0 0.0
    %1820 = vmatprep.subr.mxu0 0.0
    %1821 = vmatpush1.msra.mxu0 0.0
    %1822 = vmatprep.subr.mxu0 0.0
    %1823 = vmatpush1.msra.mxu0 0.0
    %1824 = vmatprep.subr.mxu0 0.0
    %1825 = vmatpush1.msra.mxu0 0.0
    %1826 = vmatprep.subr.mxu0 0.0
    %1827 = vmatpush1.msra.mxu0 0.0
    %1828 = vmatprep.subr.mxu0 0.0
    %1829 = vmatpush1.msra.mxu0 0.0
    %1830 = vmatprep.subr.mxu0 0.0
    %1831 = vmatpush1.msra.mxu0 0.0
    %1832 = vmatprep.subr.mxu0 0.0
    %1833 = vmatpush1.msra.mxu0 0.0
    %1834 = vmatprep.mubr.f32.mxu0 0.0
    %1835 = vmatmul.mubr.f32.gmra.mrb[0].mxu0 %v1768
    %v1836 = vpop.f32.mrb[0].mxu0
    %v1837 = vadd.f32 0.0, %v1836
    %v1838 = vpop.f32.mrb[0].mxu0
    %1839 = vdwg.mxu0
    %v1840 = vadd.f32 %v1598, %v1837
    %v1841 = vadd.f32 %v1601, %v1690
    %1842 = vrot.lane.b32.xlu0 %v162, 104
    %v1843 = vpop.permute.xlu0 %1842
    %1844 = vrot.lane.b32.xlu0 %v158, 72
    %v1845 = vpop.permute.xlu0 %1844
    %v1846 = vsel %vm166, %v1843, 0
    %v1848 = vsel %vm166, %v1845, 0
    %1850 = vmatprep.subr.mxu0 0.0
    %1851 = vmatpush1.xpose.msra.mxu0 %v1848
    %1852 = vmatprep.subr.mxu0 0.0
    %1853 = vmatpush1.xpose.msra.mxu0 0.0
    %1854 = vmatprep.subr.mxu0 0.0
    %1855 = vmatpush1.xpose.msra.mxu0 0.0
    %1856 = vmatprep.subr.mxu0 0.0
    %1857 = vmatpush1.xpose.msra.mxu0 0.0
    %1858 = vmatprep.subr.mxu0 0.0
    %1859 = vmatpush1.xpose.msra.mxu0 0.0
    %1860 = vmatprep.subr.mxu0 0.0
    %1861 = vmatpush1.xpose.msra.mxu0 0.0
    %1862 = vmatprep.subr.mxu0 0.0
    %1863 = vmatpush1.xpose.msra.mxu0 0.0
    %1864 = vmatprep.subr.mxu0 0.0
    %1865 = vmatpush1.xpose.msra.mxu0 0.0
    %1866 = vmatprep.subr.mxu0 0.0
    %1867 = vmatpush1.xpose.msra.mxu0 0.0
    %1868 = vmatprep.subr.mxu0 0.0
    %1869 = vmatpush1.xpose.msra.mxu0 0.0
    %1870 = vmatprep.subr.mxu0 0.0
    %1871 = vmatpush1.xpose.msra.mxu0 0.0
    %1872 = vmatprep.subr.mxu0 0.0
    %1873 = vmatpush1.xpose.msra.mxu0 0.0
    %1874 = vmatprep.subr.mxu0 0.0
    %1875 = vmatpush1.xpose.msra.mxu0 0.0
    %1876 = vmatprep.subr.mxu0 0.0
    %1877 = vmatpush1.xpose.msra.mxu0 0.0
    %1878 = vmatprep.subr.mxu0 0.0
    %1879 = vmatpush1.xpose.msra.mxu0 0.0
    %1880 = vmatprep.subr.mxu0 0.0
    %1881 = vmatpush1.xpose.msra.mxu0 0.0
    %1882 = vmatprep.subr.mxu0 0.0
    %1883 = vmatpush1.xpose.msra.mxu0 0.0
    %1884 = vmatprep.subr.mxu0 0.0
    %1885 = vmatpush1.xpose.msra.mxu0 0.0
    %1886 = vmatprep.subr.mxu0 0.0
    %1887 = vmatpush1.xpose.msra.mxu0 0.0
    %1888 = vmatprep.subr.mxu0 0.0
    %1889 = vmatpush1.xpose.msra.mxu0 0.0
    %1890 = vmatprep.subr.mxu0 0.0
    %1891 = vmatpush1.xpose.msra.mxu0 0.0
    %1892 = vmatprep.subr.mxu0 0.0
    %1893 = vmatpush1.xpose.msra.mxu0 0.0
    %1894 = vmatprep.subr.mxu0 0.0
    %1895 = vmatpush1.xpose.msra.mxu0 0.0
    %1896 = vmatprep.subr.mxu0 0.0
    %1897 = vmatpush1.xpose.msra.mxu0 0.0
    %1898 = vmatprep.subr.mxu0 0.0
    %1899 = vmatpush1.xpose.msra.mxu0 0.0
    %1900 = vmatprep.subr.mxu0 0.0
    %1901 = vmatpush1.xpose.msra.mxu0 0.0
    %1902 = vmatprep.subr.mxu0 0.0
    %1903 = vmatpush1.xpose.msra.mxu0 0.0
    %1904 = vmatprep.subr.mxu0 0.0
    %1905 = vmatpush1.xpose.msra.mxu0 0.0
    %1906 = vmatprep.subr.mxu0 0.0
    %1907 = vmatpush1.xpose.msra.mxu0 0.0
    %1908 = vmatprep.subr.mxu0 0.0
    %1909 = vmatpush1.xpose.msra.mxu0 0.0
    %1910 = vmatprep.subr.mxu0 0.0
    %1911 = vmatpush1.xpose.msra.mxu0 0.0
    %1912 = vmatprep.subr.mxu0 0.0
    %1913 = vmatpush1.xpose.msra.mxu0 0.0
    %1914 = vmatprep.mubr.f32.mxu0 0.0
    %1915 = vmatmul.mubr.f32.gmra.mrb[0].mxu0 %v1846
    %v1916 = vpop.f32.mrb[0].mxu0
    %v1917 = vadd.f32 0.0, %v1916
    %v1918 = vpop.f32.mrb[0].mxu0
    %1919 = vdwg.mxu0
    %v1920 = vsel %vm166, %v1917, -inf
    %1921 = vmax.xlane.f32.xlu0 %v1920
    %v1922 = vpop.xlane.xlu0 %1921
    %v1923 = vsub.f32 %v1917, %v1922
    %v1924 = vmul.f32 %v1923, 1.442695
    %v1925 = vpow.pop %v1924
    %v1926 = vsel %vm166, %v1925, 0.0
    %1927 = vadd.xlane.f32.xlu0 %v1926
    %v1928 = vpop.xlane.xlu0 %1927
    %v1929 = vrcp.pop %v1928
    %v1930 = vmul.f32 %v1925, %v1929
    %1931 = vrot.lane.b32.xlu0 %v158, 40
    %v1932 = vpop.permute.xlu0 %1931
    %v1935 = vsel %vm166, %v1930, 0
    %1937 = vmatprep.subr.mxu0 0.0
    %1938 = vmatpush1.msra.mxu0 %v1932
    %1939 = vmatprep.subr.mxu0 0.0
    %1940 = vmatpush1.msra.mxu0 0.0
    %1941 = vmatprep.subr.mxu0 0.0
    %1942 = vmatpush1.msra.mxu0 0.0
    %1943 = vmatprep.subr.mxu0 0.0
    %1944 = vmatpush1.msra.mxu0 0.0
    %1945 = vmatprep.subr.mxu0 0.0
    %1946 = vmatpush1.msra.mxu0 0.0
    %1947 = vmatprep.subr.mxu0 0.0
    %1948 = vmatpush1.msra.mxu0 0.0
    %1949 = vmatprep.subr.mxu0 0.0
    %1950 = vmatpush1.msra.mxu0 0.0
    %1951 = vmatprep.subr.mxu0 0.0
    %1952 = vmatpush1.msra.mxu0 0.0
    %1953 = vmatprep.subr.mxu0 0.0
    %1954 = vmatpush1.msra.mxu0 0.0
    %1955 = vmatprep.subr.mxu0 0.0
    %1956 = vmatpush1.msra.mxu0 0.0
    %1957 = vmatprep.subr.mxu0 0.0
    %1958 = vmatpush1.msra.mxu0 0.0
    %1959 = vmatprep.subr.mxu0 0.0
    %1960 = vmatpush1.msra.mxu0 0.0
    %1961 = vmatprep.subr.mxu0 0.0
    %1962 = vmatpush1.msra.mxu0 0.0
    %1963 = vmatprep.subr.mxu0 0.0
    %1964 = vmatpush1.msra.mxu0 0.0
    %1965 = vmatprep.subr.mxu0 0.0
    %1966 = vmatpush1.msra.mxu0 0.0
    %1967 = vmatprep.subr.mxu0 0.0
    %1968 = vmatpush1.msra.mxu0 0.0
    %1969 = vmatprep.subr.mxu0 0.0
    %1970 = vmatpush1.msra.mxu0 0.0
    %1971 = vmatprep.subr.mxu0 0.0
    %1972 = vmatpush1.msra.mxu0 0.0
    %1973 = vmatprep.subr.mxu0 0.0
    %1974 = vmatpush1.msra.mxu0 0.0
    %1975 = vmatprep.subr.mxu0 0.0
    %1976 = vmatpush1.msra.mxu0 0.0
    %1977 = vmatprep.subr.mxu0 0.0
    %1978 = vmatpush1.msra.mxu0 0.0
    %1979 = vmatprep.subr.mxu0 0.0
    %1980 = vmatpush1.msra.mxu0 0.0
    %1981 = vmatprep.subr.mxu0 0.0
    %1982 = vmatpush1.msra.mxu0 0.0
    %1983 = vmatprep.subr.mxu0 0.0
    %1984 = vmatpush1.msra.mxu0 0.0
    %1985 = vmatprep.subr.mxu0 0.0
    %1986 = vmatpush1.msra.mxu0 0.0
    %1987 = vmatprep.subr.mxu0 0.0
    %1988 = vmatpush1.msra.mxu0 0.0
    %1989 = vmatprep.subr.mxu0 0.0
    %1990 = vmatpush1.msra.mxu0 0.0
    %1991 = vmatprep.subr.mxu0 0.0
    %1992 = vmatpush1.msra.mxu0 0.0
    %1993 = vmatprep.subr.mxu0 0.0
    %1994 = vmatpush1.msra.mxu0 0.0
    %1995 = vmatprep.subr.mxu0 0.0
    %1996 = vmatpush1.msra.mxu0 0.0
    %1997 = vmatprep.subr.mxu0 0.0
    %1998 = vmatpush1.msra.mxu0 0.0
    %1999 = vmatprep.subr.mxu0 0.0
    %2000 = vmatpush1.msra.mxu0 0.0
    %2001 = vmatprep.mubr.f32.mxu0 0.0
    %2002 = vmatmul.mubr.f32.gmra.mrb[0].mxu0 %v1935
    %v2003 = vpop.f32.mrb[0].mxu0
    %v2004 = vadd.f32 0.0, %v2003
    %v2005 = vpop.f32.mrb[0].mxu0
    %2006 = vdwg.mxu0
    %v2008 = vsel %vm166, %v2004, 0
    %2010 = vmatprep.subr.mxu0 0.0
    %2011 = vmatpush1.msra.mxu0 %v67
    %2012 = vmatprep.subr.mxu0 0.0
    %2013 = vmatpush1.msra.mxu0 0.0
    %2014 = vmatprep.subr.mxu0 0.0
    %2015 = vmatpush1.msra.mxu0 0.0
    %2016 = vmatprep.subr.mxu0 0.0
    %2017 = vmatpush1.msra.mxu0 0.0
    %2018 = vmatprep.subr.mxu0 0.0
    %2019 = vmatpush1.msra.mxu0 0.0
    %2020 = vmatprep.subr.mxu0 0.0
    %2021 = vmatpush1.msra.mxu0 0.0
    %2022 = vmatprep.subr.mxu0 0.0
    %2023 = vmatpush1.msra.mxu0 0.0
    %2024 = vmatprep.subr.mxu0 0.0
    %2025 = vmatpush1.msra.mxu0 0.0
    %2026 = vmatprep.subr.mxu0 0.0
    %2027 = vmatpush1.msra.mxu0 0.0
    %2028 = vmatprep.subr.mxu0 0.0
    %2029 = vmatpush1.msra.mxu0 0.0
    %2030 = vmatprep.subr.mxu0 0.0
    %2031 = vmatpush1.msra.mxu0 0.0
    %2032 = vmatprep.subr.mxu0 0.0
    %2033 = vmatpush1.msra.mxu0 0.0
    %2034 = vmatprep.subr.mxu0 0.0
    %2035 = vmatpush1.msra.mxu0 0.0
    %2036 = vmatprep.subr.mxu0 0.0
    %2037 = vmatpush1.msra.mxu0 0.0
    %2038 = vmatprep.subr.mxu0 0.0
    %2039 = vmatpush1.msra.mxu0 0.0
    %2040 = vmatprep.subr.mxu0 0.0
    %2041 = vmatpush1.msra.mxu0 0.0
    %2042 = vmatprep.subr.mxu0 0.0
    %2043 = vmatpush1.msra.mxu0 0.0
    %2044 = vmatprep.subr.mxu0 0.0
    %2045 = vmatpush1.msra.mxu0 0.0
    %2046 = vmatprep.subr.mxu0 0.0
    %2047 = vmatpush1.msra.mxu0 0.0
    %2048 = vmatprep.subr.mxu0 0.0
    %2049 = vmatpush1.msra.mxu0 0.0
    %2050 = vmatprep.subr.mxu0 0.0
    %2051 = vmatpush1.msra.mxu0 0.0
    %2052 = vmatprep.subr.mxu0 0.0
    %2053 = vmatpush1.msra.mxu0 0.0
    %2054 = vmatprep.subr.mxu0 0.0
    %2055 = vmatpush1.msra.mxu0 0.0
    %2056 = vmatprep.subr.mxu0 0.0
    %2057 = vmatpush1.msra.mxu0 0.0
    %2058 = vmatprep.subr.mxu0 0.0
    %2059 = vmatpush1.msra.mxu0 0.0
    %2060 = vmatprep.subr.mxu0 0.0
    %2061 = vmatpush1.msra.mxu0 0.0
    %2062 = vmatprep.subr.mxu0 0.0
    %2063 = vmatpush1.msra.mxu0 0.0
    %2064 = vmatprep.subr.mxu0 0.0
    %2065 = vmatpush1.msra.mxu0 0.0
    %2066 = vmatprep.subr.mxu0 0.0
    %2067 = vmatpush1.msra.mxu0 0.0
    %2068 = vmatprep.subr.mxu0 0.0
    %2069 = vmatpush1.msra.mxu0 0.0
    %2070 = vmatprep.subr.mxu0 0.0
    %2071 = vmatpush1.msra.mxu0 0.0
    %2072 = vmatprep.subr.mxu0 0.0
    %2073 = vmatpush1.msra.mxu0 0.0
    %2074 = vmatprep.mubr.f32.mxu0 0.0
    %2075 = vmatmul.mubr.f32.gmra.mrb[0].mxu0 %v2008
    %v2076 = vpop.f32.mrb[0].mxu0
    %v2077 = vadd.f32 0.0, %v2076
    %v2078 = vpop.f32.mrb[0].mxu0
    %2079 = vdwg.mxu0
    %v2080 = vadd.f32 %v1840, %v2077
    %v2081 = vadd.f32 %v1841, %v1930
    %v2082 = vmul.f32 %v2081, 0.25
    %s2083 = scalar_lea.vmem [#allocation6], 8
    %2084 = vst.msk [vmem:[%s2083] sm:$0xff] %vm166, %v2082
    %v2085 = vld [vmem:[%s4] sm:$0x1]
    %v2087 = vlaneseq
    %v2088 = vshrl.u32 %v2087, 7
    %v2089 = vsub.s32 0, %v2088
    %v2090 = vrot.slane %v2085, %v2089
    %v2092 = vadd.f32 %v1120, %v2090
    %v2093 = vadd.f32 %v2080, %v2090
    %v2094 = vadd.f32 %v62, %v2092
    %v2095 = vadd.f32 %v63, %v2093
    %v2096 = vsel %vm79, %v2094, 0.0
    %2097 = vadd.xlane.f32.xlu0 %v2096
    %v2098 = vpop.xlane.xlu0 %2097
    %v2099 = vsel %vm79, %v2095, 0.0
    %2100 = vadd.xlane.f32.xlu0 %v2099
    %v2101 = vpop.xlane.xlu0 %2100
    %v2102 = vrcp.pop 32.0
    %v2103 = vmul.f32 %v2098, %v2102
    %v2104 = vmul.f32 %v2101, %v2102
    %v2105 = vsub.f32 %v2094, %v2103
    %v2106 = vsub.f32 %v2095, %v2104
    %v2107 = vmul.f32 %v2105, %v2105
    %v2108 = vmul.f32 %v2106, %v2106
    %v2109 = vsel %vm79, %v2107, 0.0
    %2110 = vadd.xlane.f32.xlu0 %v2109
    %v2111 = vpop.xlane.xlu0 %2110
    %v2112 = vsel %vm79, %v2108, 0.0
    %2113 = vadd.xlane.f32.xlu0 %v2112
    %v2114 = vpop.xlane.xlu0 %2113
    %v2115 = vmul.f32 %v2111, %v2102
    %v2116 = vmul.f32 %v2114, %v2102
    %v2117 = vadd.f32 %v2115, 1e-05
    %v2118 = vadd.f32 %v2116, 1e-05
    %v2119 = vrsqrt.pop %v2117
    %v2120 = vrsqrt.pop %v2118
    %v2121 = vmul.f32 %v2105, %v2119
    %v2122 = vmul.f32 %v2106, %v2120
    %v2123 = vld [vmem:[%s9] sm:$0x1]
    %v2125 = vlaneseq
    %v2126 = vshrl.u32 %v2125, 7
    %v2127 = vsub.s32 0, %v2126
    %v2128 = vrot.slane %v2123, %v2127
    %v2130 = vmul.f32 %v2121, %v2128
    %v2131 = vmul.f32 %v2122, %v2128
    %v2132 = vld [vmem:[%s10] sm:$0x1]
    %v2134 = vlaneseq
    %v2135 = vshrl.u32 %v2134, 7
    %v2136 = vsub.s32 0, %v2135
    %v2137 = vrot.slane %v2132, %v2136
    %v2139 = vadd.f32 %v2130, %v2137
    %v2140 = vadd.f32 %v2131, %v2137
    %v2141 = vld [vmem:[%s5] sm:$0xff]
    %v2142 = vld [vmem:[%s5 + $0x8] sm:$0xff]
    %v2143 = vld [vmem:[%s5 + $0x10] sm:$0xff]
    %v2144 = vld [vmem:[%s5 + $0x18] sm:$0xff]
    %v2145 = vld [vmem:[%s6] sm:$0x1]
    %v2147 = vlaneseq
    %v2148 = vshrl.u32 %v2147, 7
    %v2149 = vsub.s32 0, %v2148
    %v2150 = vrot.slane %v2145, %v2149
    %v2153 = vsel %vm79, %v2139, 0
    %v2156 = vsel %vm79, %v2140, 0
    %2158 = vmatprep.subr.mxu0 0.0
    %2159 = vmatpush1.msra.mxu0 %v2141
    %2160 = vmatprep.subr.mxu0 0.0
    %2161 = vmatpush1.msra.mxu0 %v2142
    %2162 = vmatprep.subr.mxu0 0.0
    %2163 = vmatpush1.msra.mxu0 %v2143
    %2164 = vmatprep.subr.mxu0 0.0
    %2165 = vmatpush1.msra.mxu0 %v2144
    %2166 = vmatprep.subr.mxu0 0.0
    %2167 = vmatpush1.msra.mxu0 0.0
    %2168 = vmatprep.subr.mxu0 0.0
    %2169 = vmatpush1.msra.mxu0 0.0
    %2170 = vmatprep.subr.mxu0 0.0
    %2171 = vmatpush1.msra.mxu0 0.0
    %2172 = vmatprep.subr.mxu0 0.0
    %2173 = vmatpush1.msra.mxu0 0.0
    %2174 = vmatprep.subr.mxu0 0.0
    %2175 = vmatpush1.msra.mxu0 0.0
    %2176 = vmatprep.subr.mxu0 0.0
    %2177 = vmatpush1.msra.mxu0 0.0
    %2178 = vmatprep.subr.mxu0 0.0
    %2179 = vmatpush1.msra.mxu0 0.0
    %2180 = vmatprep.subr.mxu0 0.0
    %2181 = vmatpush1.msra.mxu0 0.0
    %2182 = vmatprep.subr.mxu0 0.0
    %2183 = vmatpush1.msra.mxu0 0.0
    %2184 = vmatprep.subr.mxu0 0.0
    %2185 = vmatpush1.msra.mxu0 0.0
    %2186 = vmatprep.subr.mxu0 0.0
    %2187 = vmatpush1.msra.mxu0 0.0
    %2188 = vmatprep.subr.mxu0 0.0
    %2189 = vmatpush1.msra.mxu0 0.0
    %2190 = vmatprep.subr.mxu0 0.0
    %2191 = vmatpush1.msra.mxu0 0.0
    %2192 = vmatprep.subr.mxu0 0.0
    %2193 = vmatpush1.msra.mxu0 0.0
    %2194 = vmatprep.subr.mxu0 0.0
    %2195 = vmatpush1.msra.mxu0 0.0
    %2196 = vmatprep.subr.mxu0 0.0
    %2197 = vmatpush1.msra.mxu0 0.0
    %2198 = vmatprep.subr.mxu0 0.0
    %2199 = vmatpush1.msra.mxu0 0.0
    %2200 = vmatprep.subr.mxu0 0.0
    %2201 = vmatpush1.msra.mxu0 0.0
    %2202 = vmatprep.subr.mxu0 0.0
    %2203 = vmatpush1.msra.mxu0 0.0
    %2204 = vmatprep.subr.mxu0 0.0
    %2205 = vmatpush1.msra.mxu0 0.0
    %2206 = vmatprep.subr.mxu0 0.0
    %2207 = vmatpush1.msra.mxu0 0.0
    %2208 = vmatprep.subr.mxu0 0.0
    %2209 = vmatpush1.msra.mxu0 0.0
    %2210 = vmatprep.subr.mxu0 0.0
    %2211 = vmatpush1.msra.mxu0 0.0
    %2212 = vmatprep.subr.mxu0 0.0
    %2213 = vmatpush1.msra.mxu0 0.0
    %2214 = vmatprep.subr.mxu0 0.0
    %2215 = vmatpush1.msra.mxu0 0.0
    %2216 = vmatprep.subr.mxu0 0.0
    %2217 = vmatpush1.msra.mxu0 0.0
    %2218 = vmatprep.subr.mxu0 0.0
    %2219 = vmatpush1.msra.mxu0 0.0
    %2220 = vmatprep.subr.mxu0 0.0
    %2221 = vmatpush1.msra.mxu0 0.0
    %2222 = vmatprep.mubr.f32.mxu0 0.0
    %2223 = vmatmul.mubr.f32.gmra.mrb[0].mxu0 %v2153
    %v2224 = vpop.f32.mrb[0].mxu0
    %v2225 = vadd.f32 %v2150, %v2224
    %v2226 = vpop.f32.mrb[0].mxu0
    %2227 = vmatprep.mubr.f32.mxu0 0.0
    %2228 = vmatmul.mubr.f32.gmra.mrb[0].mxu0 %v2156
    %v2229 = vpop.f32.mrb[0].mxu0
    %v2230 = vadd.f32 %v2150, %v2229
    %v2231 = vpop.f32.mrb[0].mxu0
    %2232 = vdwg.mxu0
    %v2233 = vmax.f32 %v2225, 0.0
    %v2234 = vmax.f32 %v2230, 0.0
    %v2235 = vld [vmem:[%s7] sm:$0xff]
    %v2236 = vld [vmem:[%s7 + $0x8] sm:$0xff]
    %v2237 = vld [vmem:[%s7 + $0x10] sm:$0xff]
    %v2238 = vld [vmem:[%s7 + $0x18] sm:$0xff]
    %v2239 = vld [vmem:[%s7 + $0x20] sm:$0xff]
    %v2240 = vld [vmem:[%s7 + $0x28] sm:$0xff]
    %v2241 = vld [vmem:[%s7 + $0x30] sm:$0xff]
    %v2242 = vld [vmem:[%s7 + $0x38] sm:$0xff]
    %v2243 = vld [vmem:[%s8] sm:$0x1]
    %v2245 = vlaneseq
    %v2246 = vshrl.u32 %v2245, 7
    %v2247 = vsub.s32 0, %v2246
    %v2248 = vrot.slane %v2243, %v2247
    %vm2250 = vcmask 523264
    %v2252 = vsel %vm2250, %v2233, 0
    %v2255 = vsel %vm2250, %v2234, 0
    %2257 = vmatprep.subr.mxu0 0.0
    %2258 = vmatpush1.msra.mxu0 %v2235
    %2259 = vmatprep.subr.mxu0 0.0
    %2260 = vmatpush1.msra.mxu0 %v2236
    %2261 = vmatprep.subr.mxu0 0.0
    %2262 = vmatpush1.msra.mxu0 %v2237
    %2263 = vmatprep.subr.mxu0 0.0
    %2264 = vmatpush1.msra.mxu0 %v2238
    %2265 = vmatprep.subr.mxu0 0.0
    %2266 = vmatpush1.msra.mxu0 %v2239
    %2267 = vmatprep.subr.mxu0 0.0
    %2268 = vmatpush1.msra.mxu0 %v2240
    %2269 = vmatprep.subr.mxu0 0.0
    %2270 = vmatpush1.msra.mxu0 %v2241
    %2271 = vmatprep.subr.mxu0 0.0
    %2272 = vmatpush1.msra.mxu0 %v2242
    %2273 = vmatprep.subr.mxu0 0.0
    %2274 = vmatpush1.msra.mxu0 0.0
    %2275 = vmatprep.subr.mxu0 0.0
    %2276 = vmatpush1.msra.mxu0 0.0
    %2277 = vmatprep.subr.mxu0 0.0
    %2278 = vmatpush1.msra.mxu0 0.0
    %2279 = vmatprep.subr.mxu0 0.0
    %2280 = vmatpush1.msra.mxu0 0.0
    %2281 = vmatprep.subr.mxu0 0.0
    %2282 = vmatpush1.msra.mxu0 0.0
    %2283 = vmatprep.subr.mxu0 0.0
    %2284 = vmatpush1.msra.mxu0 0.0
    %2285 = vmatprep.subr.mxu0 0.0
    %2286 = vmatpush1.msra.mxu0 0.0
    %2287 = vmatprep.subr.mxu0 0.0
    %2288 = vmatpush1.msra.mxu0 0.0
    %2289 = vmatprep.subr.mxu0 0.0
    %2290 = vmatpush1.msra.mxu0 0.0
    %2291 = vmatprep.subr.mxu0 0.0
    %2292 = vmatpush1.msra.mxu0 0.0
    %2293 = vmatprep.subr.mxu0 0.0
    %2294 = vmatpush1.msra.mxu0 0.0
    %2295 = vmatprep.subr.mxu0 0.0
    %2296 = vmatpush1.msra.mxu0 0.0
    %2297 = vmatprep.subr.mxu0 0.0
    %2298 = vmatpush1.msra.mxu0 0.0
    %2299 = vmatprep.subr.mxu0 0.0
    %2300 = vmatpush1.msra.mxu0 0.0
    %2301 = vmatprep.subr.mxu0 0.0
    %2302 = vmatpush1.msra.mxu0 0.0
    %2303 = vmatprep.subr.mxu0 0.0
    %2304 = vmatpush1.msra.mxu0 0.0
    %2305 = vmatprep.subr.mxu0 0.0
    %2306 = vmatpush1.msra.mxu0 0.0
    %2307 = vmatprep.subr.mxu0 0.0
    %2308 = vmatpush1.msra.mxu0 0.0
    %2309 = vmatprep.subr.mxu0 0.0
    %2310 = vmatpush1.msra.mxu0 0.0
    %2311 = vmatprep.subr.mxu0 0.0
    %2312 = vmatpush1.msra.mxu0 0.0
    %2313 = vmatprep.subr.mxu0 0.0
    %2314 = vmatpush1.msra.mxu0 0.0
    %2315 = vmatprep.subr.mxu0 0.0
    %2316 = vmatpush1.msra.mxu0 0.0
    %2317 = vmatprep.subr.mxu0 0.0
    %2318 = vmatpush1.msra.mxu0 0.0
    %2319 = vmatprep.subr.mxu0 0.0
    %2320 = vmatpush1.msra.mxu0 0.0
    %2321 = vmatprep.mubr.f32.mxu0 0.0
    %2322 = vmatmul.mubr.f32.gmra.mrb[0].mxu0 %v2252
    %v2323 = vpop.f32.mrb[0].mxu0
    %v2324 = vadd.f32 %v2248, %v2323
    %v2325 = vpop.f32.mrb[0].mxu0
    %2326 = vmatprep.mubr.f32.mxu0 0.0
    %2327 = vmatmul.mubr.f32.gmra.mrb[0].mxu0 %v2255
    %v2328 = vpop.f32.mrb[0].mxu0
    %v2329 = vadd.f32 %v2248, %v2328
    %v2330 = vpop.f32.mrb[0].mxu0
    %2331 = vdwg.mxu0
    %v2332 = vadd.f32 %v2139, %v2324
    %v2333 = vadd.f32 %v2140, %v2329
    %v2334 = vsel %vm79, %v2332, 0.0
    %2335 = vadd.xlane.f32.xlu0 %v2334
    %v2336 = vpop.xlane.xlu0 %2335
    %v2337 = vsel %vm79, %v2333, 0.0
    %2338 = vadd.xlane.f32.xlu0 %v2337
    %v2339 = vpop.xlane.xlu0 %2338
    %v2340 = vmul.f32 %v2336, %v2102
    %v2341 = vmul.f32 %v2339, %v2102
    %v2342 = vsub.f32 %v2332, %v2340
    %v2343 = vsub.f32 %v2333, %v2341
    %v2344 = vmul.f32 %v2342, %v2342
    %v2345 = vmul.f32 %v2343, %v2343
    %v2346 = vsel %vm79, %v2344, 0.0
    %2347 = vadd.xlane.f32.xlu0 %v2346
    %v2348 = vpop.xlane.xlu0 %2347
    %v2349 = vsel %vm79, %v2345, 0.0
    %2350 = vadd.xlane.f32.xlu0 %v2349
    %v2351 = vpop.xlane.xlu0 %2350
    %v2352 = vmul.f32 %v2348, %v2102
    %v2353 = vmul.f32 %v2351, %v2102
    %v2354 = vadd.f32 %v2352, 1e-05
    %v2355 = vadd.f32 %v2353, 1e-05
    %v2356 = vrsqrt.pop %v2354
    %v2357 = vrsqrt.pop %v2355
    %v2358 = vmul.f32 %v2342, %v2356
    %v2359 = vmul.f32 %v2343, %v2357
    %v2360 = vld [vmem:[%s11] sm:$0x1]
    %v2362 = vlaneseq
    %v2363 = vshrl.u32 %v2362, 7
    %v2364 = vsub.s32 0, %v2363
    %v2365 = vrot.slane %v2360, %v2364
    %v2367 = vmul.f32 %v2358, %v2365
    %v2368 = vmul.f32 %v2359, %v2365
    %v2369 = vld [vmem:[%s12] sm:$0x1]
    %v2371 = vlaneseq
    %v2372 = vshrl.u32 %v2371, 7
    %v2373 = vsub.s32 0, %v2372
    %v2374 = vrot.slane %v2369, %v2373
    %v2376 = vadd.f32 %v2367, %v2374
    %v2377 = vadd.f32 %v2368, %v2374
    %2378 = vst.msk [vmem:[#allocation5] sm:$0xff] %vm79, %v2376
    %2379 = vst.msk [vmem:[#allocation5 + $0x8] sm:$0xff] %vm79, %v2377
    // Predicated region
    $region58: #{tpu_custom_call.1} parent=1 // pred_check
      _
    $region59: #{tpu_custom_call.1} parent=1 // pred_check_branch
      %2381 = sbr.rel (0) target = $region61
    $region60: #{tpu_custom_call.1} parent=1 // pred_region
      %s2383 = ssub.s32 256, 256
      %2384 = vsyncadd [#allocation4], %s2383
      %s2385 = sshll.u32 [#allocation5], 4
      %s2386 = int_to_ptr.vmem [resolvable:$true] %s2385
      %2391 = dma.vmem_to_hbm [thread:$0]  %s2386, 256, %s13, [#allocation4], 128, 128, 8
    $region61: #{tpu_custom_call.1} parent=1 // pred_fallthru
      _
    // Predicated region
    $region62: #{tpu_custom_call.1} parent=1 // pred_check
      _
    $region63: #{tpu_custom_call.1} parent=1 // pred_check_branch
      %2393 = sbr.rel (0) target = $region65
    $region64: #{tpu_custom_call.1} parent=1 // pred_region
      %s2395 = ssub.s32 256, 256
      %2396 = vsyncadd [#allocation7], %s2395
      %s2397 = sshll.u32 [#allocation6], 4
      %s2398 = int_to_ptr.vmem [resolvable:$true] %s2397
      %2403 = dma.vmem_to_hbm [thread:$0]  %s2398, 256, %s14, [#allocation7], 128, 128, 8
    $region65: #{tpu_custom_call.1} parent=1 // pred_fallthru
      _
    // Predicated region
    $region66: #{tpu_custom_call.1} parent=1 // pred_check
      _
    $region67: #{tpu_custom_call.1} parent=1 // pred_check_branch
      %2405 = sbr.rel (0) target = $region69
    $region68: #{tpu_custom_call.1} parent=1 // pred_region
      %2406 = dma.done [#allocation4], 256
    $region69: #{tpu_custom_call.1} parent=1 // pred_fallthru
      _
    // Predicated region
    $region70: #{tpu_custom_call.1} parent=1 // pred_check
      _
    $region71: #{tpu_custom_call.1} parent=1 // pred_check_branch
      %2408 = sbr.rel (0) target = $region73
    $region72: #{tpu_custom_call.1} parent=1 // pred_region
      %2409 = dma.done [#allocation7], 256
    $region73: #{tpu_custom_call.1} parent=1 // pred_fallthru
      _
    %2410 = vsyncpa [#allocation3], 1
    %2411 = vsyncpa [#allocation4], 1
    %2412 = vsyncpa [#allocation7], 1

</llo_original>
